<compile_context>
chip_gen: v5e
topology: v5e:2x2
jax: 0.10.0
libtpu: 0.0.40
codegen_flags: <defaults>
</compile_context>

<pallas_src>
import math

import jax
import jax.numpy as jnp
from jax import lax
from jax.experimental import pallas as pl
from jax.experimental.pallas import tpu as pltpu


_SQRT_HALF = 1.0 / math.sqrt(2.0)
_TANH_C = math.sqrt(2.0 / math.pi)


def _gelu_exact(x):
    # PyTorch nn.GELU() default is the exact erf formulation.
    return 0.5 * x * (1.0 + lax.erf(x * _SQRT_HALF))


def _gelu_tanh(x):
    # tanh approximation -> EUP transcendental slot (use when VALU-bound).
    return 0.5 * x * (1.0 + jnp.tanh(_TANH_C * (x + 0.044715 * x * x * x)))


def _make_mlp_kernel(n_hchunks, hchunk, approximate_gelu):
    gelu = _gelu_tanh if approximate_gelu else _gelu_exact

    def kernel(x_ref, w1_ref, b1_ref, w2_ref, b2_ref, o_ref):
        # x_ref:  (1, Cin, tm)     pixels on lanes
        # w1_ref: (Chid_p, Cin)    b1_ref: (Chid_p, 1)  (f32)
        # w2_ref: (Cout, Chid_p)   b2_ref: (Cout, 1)    (f32)
        # o_ref:  (1, Cout, tm)
        x = x_ref[0]                                   # (Cin, tm)
        o = None
        # Static, fully unrolled hidden-chunk loop: static ref slices are free
        # views; first chunk writes the accumulator value, later chunks add.
        for k in range(n_hchunks):
            lo, hi = k * hchunk, (k + 1) * hchunk
            h = jnp.dot(w1_ref[lo:hi, :], x,
                        preferred_element_type=jnp.float32)     # (hchunk, tm)
            h = gelu(h + b1_ref[lo:hi, :])
            c = jnp.dot(w2_ref[:, lo:hi], h.astype(w2_ref.dtype),
                        preferred_element_type=jnp.float32)     # (Cout, tm)
            o = c if o is None else o + c
        o_ref[0] = (o + b2_ref[...]).astype(o_ref.dtype)

    return kernel


def _tpu_vmem_capacity_bytes():
    try:
        return int(pltpu.get_tpu_info().vmem_capacity_bytes)
    except Exception:
        return 64 * 1024 * 1024   # conservative (v7x per-TC VMEM)


def _round_up(x, m):
    return ((x + m - 1) // m) * m


def distributed_mlp_forward(x_nchw, w1, b1, w2, b2, *, tm_max=2048,
                            hidden_chunk=512, approximate_gelu=False,
                            compute_dtype=None):
    """x_nchw: (N, Cin, H, W). w1: (Chid, Cin, 1, 1). w2: (Cout, Chid, 1, 1).

    compute_dtype=jnp.bfloat16 casts x/w1/w2 for full-rate MXU (f32 accum).
    """
    N, Cin, H, W = x_nchw.shape
    Chid = w1.shape[0]
    Cout = w2.shape[0]
    HW = H * W
    out_dtype = x_nchw.dtype

    if compute_dtype is not None:
        x_nchw = x_nchw.astype(compute_dtype)
        w1 = w1.astype(compute_dtype)
        w2 = w2.astype(compute_dtype)
    x3 = x_nchw.reshape(N, Cin, HW)                    # free reshape, no pad

    w_itemsize = jnp.dtype(w1.dtype).itemsize
    x_itemsize = jnp.dtype(x3.dtype).itemsize
    sublane = 8 if w_itemsize >= 4 else 32 // w_itemsize

    # ---- hidden-dim chunking (weights-only zero padding is exact) ----------
    if Chid > hidden_chunk:
        hchunk = max(128, (hidden_chunk // 128) * 128)
        Chid_p = _round_up(Chid, hchunk)
    else:
        Chid_p = _round_up(Chid, sublane)
        hchunk = Chid_p
    n_hchunks = Chid_p // hchunk

    w1_2d = w1.reshape(Chid, Cin)
    w2_2d = w2.reshape(Cout, Chid)
    b1_col = b1.reshape(Chid, 1).astype(jnp.float32)
    b2_col = b2.reshape(Cout, 1).astype(jnp.float32)
    if Chid_p != Chid:
        pad = Chid_p - Chid
        w1_2d = jnp.pad(w1_2d, ((0, pad), (0, 0)))
        b1_col = jnp.pad(b1_col, ((0, pad), (0, 0)))
        w2_2d = jnp.pad(w2_2d, ((0, 0), (0, pad)))

    # ---- generation-aware VMEM budgeting ------------------------------------
    vmem_cap = _tpu_vmem_capacity_bytes()
    budget = int(vmem_cap * 0.80)        # ~102 MiB on v5e/v6e, ~51 MiB on v7x

    # Grid-invariant weights/biases (requested single-buffered).
    weights_bytes = (Chid_p * Cin + Cout * Chid_p) * w_itemsize \
        + (Chid_p + Cout) * 4
    # Per pixel column: double-buffered x/out blocks + ~3 live f32 (hchunk, tm)
    # temporaries (matmul result + erf-GELU temp + cast) + f32 accumulator.
    per_col = 2 * (Cin + Cout) * x_itemsize + (3 * hchunk + Cout) * 4
    cols = max(0, budget - weights_bytes) // per_col
    # TODO(synk): if the resident weights alone exceed the VMEM budget (very
    # large Chid*Cin), stream w1/w2 from HBM in Chid chunks with manual DMA.

    tm = max(128, min(tm_max, int(cols)))
    tm = (tm // 128) * 128
    if tm >= HW:
        if N >= 2 or HW <= 128:
            tm = HW                      # full-extent pixel tile (always legal)
        else:
            # N == 1: split pixels so both v7x TensorCores get >= 1 tile.
            tm = max(128, min((HW // 128) * 128, _round_up(pl.cdiv(HW, 2), 128)))
    n_ptiles = pl.cdiv(HW, tm)
    grid = (N, n_ptiles)

    vmem_limit = int(max(16 << 20,
                         min(vmem_cap,
                             2 * weights_bytes + per_col * tm + (4 << 20))))

    kernel = _make_mlp_kernel(n_hchunks, hchunk, approximate_gelu)
    out_shape = jax.ShapeDtypeStruct((N, Cout, HW), out_dtype)

    def build(single_buffer_weights):
        wkw = dict(pipeline_mode=pl.Buffered(1)) if single_buffer_weights else {}
        return pl.pallas_call(
            kernel,
            out_shape=out_shape,
            grid_spec=pltpu.PrefetchScalarGridSpec(
                num_scalar_prefetch=0,
                grid=grid,
                in_specs=[
                    pl.BlockSpec((1, Cin, tm), lambda n, j: (n, 0, j)),
                    pl.BlockSpec((Chid_p, Cin), lambda n, j: (0, 0), **wkw),
                    pl.BlockSpec((Chid_p, 1), lambda n, j: (0, 0), **wkw),
                    pl.BlockSpec((Cout, Chid_p), lambda n, j: (0, 0), **wkw),
                    pl.BlockSpec((Cout, 1), lambda n, j: (0, 0), **wkw),
                ],
                out_specs=pl.BlockSpec((1, Cout, tm), lambda n, j: (n, 0, j)),
            ),
            compiler_params=pltpu.CompilerParams(
                dimension_semantics=("parallel", "parallel"),
                vmem_limit_bytes=vmem_limit),
        )

    try:
        out3 = build(True)(x3, w1_2d, b1_col, w2_2d, b2_col)
    except Exception:
        # pipeline_mode=Buffered(1) not supported by this jax version: fall
        # back to default double-buffered weight operands (still correct).
        out3 = build(False)(x3, w1_2d, b1_col, w2_2d, b2_col)

    return out3.reshape(N, Cout, H, W)


def _trunc_normal(key, shape, std=0.02):
    # Matches trunc_normal_(std=0.02, a=-2, b=2) closely enough for a
    # deterministic synthetic init.
    return std * jax.random.truncated_normal(key, -2.0, 2.0, shape, jnp.float32)


def _reference_forward(x, w1, b1, w2, b2):
    # Pure-JAX reference of the same math (1x1 convs as einsums).
    h = jnp.einsum("nchw,oc->nohw", x, w1.reshape(w1.shape[0], w1.shape[1]))
    h = h + b1.reshape(1, -1, 1, 1)
    h = _gelu_exact(h)
    o = jnp.einsum("nchw,oc->nohw", h, w2.reshape(w2.shape[0], w2.shape[1]))
    o = o + b2.reshape(1, -1, 1, 1)
    return o


if __name__ == "__main__":
    # Small shapes: batch=2, in_features=4, hidden_features=32,
    # out_features=4, spatial 16x16.  comm_size('matmul') == 1, drop_rate=0,
    # so dropout and the distributed collectives are identities.
    N, Cin, H, W = 2, 4, 16, 16
    Chid, Cout = 32, 4

    key = jax.random.PRNGKey(0)
    kx, kw1, kw2 = jax.random.split(key, 3)

    x = jax.random.normal(kx, (N, Cin, H, W), jnp.float32)
    w1 = _trunc_normal(kw1, (Chid, Cin, 1, 1))   # nn.Parameter(hidden, in, 1, 1)
    b1 = jnp.zeros((Chid,), jnp.float32)
    w2 = _trunc_normal(kw2, (Cout, Chid, 1, 1))  # nn.Parameter(out, hidden, 1, 1)
    b2 = jnp.zeros((Cout,), jnp.float32)

    out = distributed_mlp_forward(x, w1, b1, w2, b2)
    out = jax.block_until_ready(out)

    ref = _reference_forward(x, w1, b1, w2, b2)
    assert out.shape == (N, Cout, H, W)
    assert jnp.allclose(out, ref, atol=1e-5, rtol=1e-5)

    # TODO(synk): scatter/gather/copy/reduce parallel-region collectives are
    # identities at comm_size==1; multi-device versions would need
    # make_async_remote_copy ring collectives.
    print("KERNEL_OK")
</pallas_src>

<mosaic_0001>
module attributes {stable_mosaic.version = 11 : i64} {
  func.func @kernel(%arg0: i32, %arg1: i32, %arg2: memref<1x4x256xf32, #tpu.memory_space<vmem>>, %arg3: memref<32x4xf32, #tpu.memory_space<vmem>>, %arg4: memref<32x1xf32, #tpu.memory_space<vmem>>, %arg5: memref<4x32xf32, #tpu.memory_space<vmem>>, %arg6: memref<4x1xf32, #tpu.memory_space<vmem>>, %arg7: memref<1x4x256xf32, #tpu.memory_space<vmem>>) attributes {dimension_semantics = [#tpu.dimension_semantics<parallel>, #tpu.dimension_semantics<parallel>], iteration_bounds = array<i64: 2, 1>, scalar_prefetch = 0 : i64, scratch_operands = 0 : i64, tpu.core_type = #tpu.core_type<tc>, window_params = [{transform_indices = @transform_0, window_bounds = array<i64: 1, 4, 256>}, {pipeline_mode = #tpu.pipeline_mode<synchronous>, transform_indices = @transform_1, window_bounds = array<i64: 32, 4>}, {pipeline_mode = #tpu.pipeline_mode<synchronous>, transform_indices = @transform_2, window_bounds = array<i64: 32, 1>}, {pipeline_mode = #tpu.pipeline_mode<synchronous>, transform_indices = @transform_3, window_bounds = array<i64: 4, 32>}, {pipeline_mode = #tpu.pipeline_mode<synchronous>, transform_indices = @transform_4, window_bounds = array<i64: 4, 1>}, {transform_indices = @transform_5, window_bounds = array<i64: 1, 4, 256>}]} {
    %c0 = arith.constant 0 : index
    %c0_0 = arith.constant 0 : index
    %c0_1 = arith.constant 0 : index
    %0 = vector.load %arg2[%c0, %c0_0, %c0_1] : memref<1x4x256xf32, #tpu.memory_space<vmem>>, vector<1x4x256xf32>
    %1 = vector.shape_cast %0 : vector<1x4x256xf32> to vector<4x256xf32>
    %c0_2 = arith.constant 0 : index
    %c0_3 = arith.constant 0 : index
    %2 = vector.load %arg3[%c0_2, %c0_3] : memref<32x4xf32, #tpu.memory_space<vmem>>, vector<32x4xf32>
    %cst = arith.constant dense<0.000000e+00> : vector<32x256xf32>
    %3 = tpu.matmul %2, %1, %cst {dimension_numbers = #tpu.dot_dimension_numbers<[1], [0], [0], [1], [0, 0, 1, 1], [], []>} : vector<32x4xf32>, vector<4x256xf32>, vector<32x256xf32> -> vector<32x256xf32>
    %c0_4 = arith.constant 0 : index
    %c0_5 = arith.constant 0 : index
    %4 = vector.load %arg4[%c0_4, %c0_5] : memref<32x1xf32, #tpu.memory_space<vmem>>, vector<32x1xf32>
    %5 = vector.broadcast %4 : vector<32x1xf32> to vector<32x256xf32>
    %6 = arith.addf %3, %5 : vector<32x256xf32>
    %cst_6 = arith.constant 5.000000e-01 : f32
    %7 = vector.broadcast %cst_6 : f32 to vector<32x256xf32>
    %8 = arith.mulf %7, %6 : vector<32x256xf32>
    %cst_7 = arith.constant 0.707106769 : f32
    %9 = vector.broadcast %cst_7 : f32 to vector<32x256xf32>
    %10 = arith.mulf %6, %9 : vector<32x256xf32>
    %11 = math.erf %10 : vector<32x256xf32>
    %cst_8 = arith.constant 1.000000e+00 : f32
    %12 = vector.broadcast %cst_8 : f32 to vector<32x256xf32>
    %13 = arith.addf %12, %11 : vector<32x256xf32>
    %14 = arith.mulf %8, %13 : vector<32x256xf32>
    %c0_9 = arith.constant 0 : index
    %c0_10 = arith.constant 0 : index
    %15 = vector.load %arg5[%c0_9, %c0_10] : memref<4x32xf32, #tpu.memory_space<vmem>>, vector<4x32xf32>
    %cst_11 = arith.constant dense<0.000000e+00> : vector<4x256xf32>
    %16 = tpu.matmul %15, %14, %cst_11 {dimension_numbers = #tpu.dot_dimension_numbers<[1], [0], [0], [1], [0, 0, 1, 1], [], []>} : vector<4x32xf32>, vector<32x256xf32>, vector<4x256xf32> -> vector<4x256xf32>
    %c0_12 = arith.constant 0 : index
    %c0_13 = arith.constant 0 : index
    %17 = vector.load %arg6[%c0_12, %c0_13] : memref<4x1xf32, #tpu.memory_space<vmem>>, vector<4x1xf32>
    %18 = vector.broadcast %17 : vector<4x1xf32> to vector<4x256xf32>
    %19 = arith.addf %16, %18 : vector<4x256xf32>
    %c0_14 = arith.constant 0 : index
    %c0_15 = arith.constant 0 : index
    %c0_16 = arith.constant 0 : index
    %20 = vector.load %arg7[%c0_14, %c0_15, %c0_16] : memref<1x4x256xf32, #tpu.memory_space<vmem>>, vector<1x4x256xf32>
    %21 = vector.shape_cast %20 : vector<1x4x256xf32> to vector<4x256xf32>
    %22 = vector.shape_cast %19 : vector<4x256xf32> to vector<1x4x256xf32>
    tpu.vector_store %arg7[%c0_14, %c0_15, %c0_16], %22 {strides = array<i32>} : memref<1x4x256xf32, #tpu.memory_space<vmem>>, vector<1x4x256xf32>,
    return
  }
  func.func @transform_0(%arg0: i32, %arg1: i32) -> (i32, i32, i32) {
    %c0_i32 = arith.constant 0 : i32
    %c0_i32_0 = arith.constant 0 : i32
    return %arg0, %c0_i32, %arg1 : i32, i32, i32
  }
  func.func @transform_1(%arg0: i32, %arg1: i32) -> (i32, i32) {
    %c0_i32 = arith.constant 0 : i32
    %c0_i32_0 = arith.constant 0 : i32
    %c0_i32_1 = arith.constant 0 : i32
    return %c0_i32, %c0_i32_0 : i32, i32
  }
  func.func @transform_2(%arg0: i32, %arg1: i32) -> (i32, i32) {
    %c0_i32 = arith.constant 0 : i32
    %c0_i32_0 = arith.constant 0 : i32
    %c0_i32_1 = arith.constant 0 : i32
    return %c0_i32, %c0_i32_0 : i32, i32
  }
  func.func @transform_3(%arg0: i32, %arg1: i32) -> (i32, i32) {
    %c0_i32 = arith.constant 0 : i32
    %c0_i32_0 = arith.constant 0 : i32
    %c0_i32_1 = arith.constant 0 : i32
    return %c0_i32, %c0_i32_0 : i32, i32
  }
  func.func @transform_4(%arg0: i32, %arg1: i32) -> (i32, i32) {
    %c0_i32 = arith.constant 0 : i32
    %c0_i32_0 = arith.constant 0 : i32
    %c0_i32_1 = arith.constant 0 : i32
    return %c0_i32, %c0_i32_0 : i32, i32
  }
  func.func @transform_5(%arg0: i32, %arg1: i32) -> (i32, i32, i32) {
    %c0_i32 = arith.constant 0 : i32
    %c0_i32_0 = arith.constant 0 : i32
    return %arg0, %c0_i32, %arg1 : i32, i32, i32
  }
}

module attributes {stable_mosaic.version = 11 : i64} {
  func.func @kernel(%arg0: i32, %arg1: i32, %arg2: memref<1x4x256xf32, #tpu.memory_space<vmem>>, %arg3: memref<32x4xf32, #tpu.memory_space<vmem>>, %arg4: memref<32x1xf32, #tpu.memory_space<vmem>>, %arg5: memref<4x32xf32, #tpu.memory_space<vmem>>, %arg6: memref<4x1xf32, #tpu.memory_space<vmem>>, %arg7: memref<1x4x256xf32, #tpu.memory_space<vmem>>) attributes {dimension_semantics = [#tpu.dimension_semantics<parallel>, #tpu.dimension_semantics<parallel>], iteration_bounds = array<i64: 2, 1>, scalar_prefetch = 0 : i64, scratch_operands = 0 : i64, tpu.core_type = #tpu.core_type<tc>, window_params = [{transform_indices = @transform_0, window_bounds = array<i64: 1, 4, 256>}, {pipeline_mode = #tpu.pipeline_mode<synchronous>, transform_indices = @transform_1, window_bounds = array<i64: 32, 4>}, {pipeline_mode = #tpu.pipeline_mode<synchronous>, transform_indices = @transform_2, window_bounds = array<i64: 32, 1>}, {pipeline_mode = #tpu.pipeline_mode<synchronous>, transform_indices = @transform_3, window_bounds = array<i64: 4, 32>}, {pipeline_mode = #tpu.pipeline_mode<synchronous>, transform_indices = @transform_4, window_bounds = array<i64: 4, 1>}, {transform_indices = @transform_5, window_bounds = array<i64: 1, 4, 256>}]} {
    %c0 = arith.constant 0 : index
    %c0_0 = arith.constant 0 : index
    %c0_1 = arith.constant 0 : index
    %0 = vector.load %arg2[%c0, %c0_0, %c0_1] : memref<1x4x256xf32, #tpu.memory_space<vmem>>, vector<1x4x256xf32>
    %1 = vector.shape_cast %0 : vector<1x4x256xf32> to vector<4x256xf32>
    %c0_2 = arith.constant 0 : index
    %c0_3 = arith.constant 0 : index
    %2 = vector.load %arg3[%c0_2, %c0_3] : memref<32x4xf32, #tpu.memory_space<vmem>>, vector<32x4xf32>
    %cst = arith.constant dense<0.000000e+00> : vector<32x256xf32>
    %3 = tpu.matmul %2, %1, %cst {dimension_numbers = #tpu.dot_dimension_numbers<[1], [0], [0], [1], [0, 0, 1, 1], [], []>} : vector<32x4xf32>, vector<4x256xf32>, vector<32x256xf32> -> vector<32x256xf32>
    %c0_4 = arith.constant 0 : index
    %c0_5 = arith.constant 0 : index
    %4 = vector.load %arg4[%c0_4, %c0_5] : memref<32x1xf32, #tpu.memory_space<vmem>>, vector<32x1xf32>
    %5 = vector.broadcast %4 : vector<32x1xf32> to vector<32x256xf32>
    %6 = arith.addf %3, %5 : vector<32x256xf32>
    %cst_6 = arith.constant 5.000000e-01 : f32
    %7 = vector.broadcast %cst_6 : f32 to vector<32x256xf32>
    %8 = arith.mulf %7, %6 : vector<32x256xf32>
    %cst_7 = arith.constant 0.707106769 : f32
    %9 = vector.broadcast %cst_7 : f32 to vector<32x256xf32>
    %10 = arith.mulf %6, %9 : vector<32x256xf32>
    %11 = math.erf %10 : vector<32x256xf32>
    %cst_8 = arith.constant 1.000000e+00 : f32
    %12 = vector.broadcast %cst_8 : f32 to vector<32x256xf32>
    %13 = arith.addf %12, %11 : vector<32x256xf32>
    %14 = arith.mulf %8, %13 : vector<32x256xf32>
    %c0_9 = arith.constant 0 : index
    %c0_10 = arith.constant 0 : index
    %15 = vector.load %arg5[%c0_9, %c0_10] : memref<4x32xf32, #tpu.memory_space<vmem>>, vector<4x32xf32>
    %cst_11 = arith.constant dense<0.000000e+00> : vector<4x256xf32>
    %16 = tpu.matmul %15, %14, %cst_11 {dimension_numbers = #tpu.dot_dimension_numbers<[1], [0], [0], [1], [0, 0, 1, 1], [], []>} : vector<4x32xf32>, vector<32x256xf32>, vector<4x256xf32> -> vector<4x256xf32>
    %c0_12 = arith.constant 0 : index
    %c0_13 = arith.constant 0 : index
    %17 = vector.load %arg6[%c0_12, %c0_13] : memref<4x1xf32, #tpu.memory_space<vmem>>, vector<4x1xf32>
    %18 = vector.broadcast %17 : vector<4x1xf32> to vector<4x256xf32>
    %19 = arith.addf %16, %18 : vector<4x256xf32>
    %c0_14 = arith.constant 0 : index
    %c0_15 = arith.constant 0 : index
    %c0_16 = arith.constant 0 : index
    %20 = vector.load %arg7[%c0_14, %c0_15, %c0_16] : memref<1x4x256xf32, #tpu.memory_space<vmem>>, vector<1x4x256xf32>
    %21 = vector.shape_cast %20 : vector<1x4x256xf32> to vector<4x256xf32>
    %22 = vector.shape_cast %19 : vector<4x256xf32> to vector<1x4x256xf32>
    tpu.vector_store %arg7[%c0_14, %c0_15, %c0_16], %22 {strides = array<i32>} : memref<1x4x256xf32, #tpu.memory_space<vmem>>, vector<1x4x256xf32>,
    return
  }
  func.func @transform_0(%arg0: i32, %arg1: i32) -> (i32, i32, i32) {
    %c0_i32 = arith.constant 0 : i32
    %c0_i32_0 = arith.constant 0 : i32
    return %arg0, %c0_i32, %arg1 : i32, i32, i32
  }
  func.func @transform_1(%arg0: i32, %arg1: i32) -> (i32, i32) {
    %c0_i32 = arith.constant 0 : i32
    %c0_i32_0 = arith.constant 0 : i32
    %c0_i32_1 = arith.constant 0 : i32
    return %c0_i32, %c0_i32_0 : i32, i32
  }
  func.func @transform_2(%arg0: i32, %arg1: i32) -> (i32, i32) {
    %c0_i32 = arith.constant 0 : i32
    %c0_i32_0 = arith.constant 0 : i32
    %c0_i32_1 = arith.constant 0 : i32
    return %c0_i32, %c0_i32_0 : i32, i32
  }
  func.func @transform_3(%arg0: i32, %arg1: i32) -> (i32, i32) {
    %c0_i32 = arith.constant 0 : i32
    %c0_i32_0 = arith.constant 0 : i32
    %c0_i32_1 = arith.constant 0 : i32
    return %c0_i32, %c0_i32_0 : i32, i32
  }
  func.func @transform_4(%arg0: i32, %arg1: i32) -> (i32, i32) {
    %c0_i32 = arith.constant 0 : i32
    %c0_i32_0 = arith.constant 0 : i32
    %c0_i32_1 = arith.constant 0 : i32
    return %c0_i32, %c0_i32_0 : i32, i32
  }
  func.func @transform_5(%arg0: i32, %arg1: i32) -> (i32, i32, i32) {
    %c0_i32 = arith.constant 0 : i32
    %c0_i32_0 = arith.constant 0 : i32
    return %arg0, %c0_i32, %arg1 : i32, i32, i32
  }
}

</mosaic_0001>

<llo_original>
// kernel: tpu_custom_call.1
$region0: #{tpu_custom_call.1}
  #allocation0 [shape = 'u32[]', space=smem, size = 0x4, offset = 0x4, fixed_abs, tag = 'smem constant byte address 0x4 - core index']
  #allocation1 [shape = 'u32[72,128]{1,0:T(1,128)}', space=vmem, size = 0x9000, scoped, tag = 'internal scratch']
  %s0 = inlined_call_operand.vmem [shape: f32[2,4,256], index: 0, kind: input, shape index: {}]
  %s1 = inlined_call_operand.vmem [shape: f32[32,4], index: 1, kind: input, shape index: {}]
  %s2 = inlined_call_operand.vmem [shape: f32[32,1], index: 2, kind: input, shape index: {}]
  %s3 = inlined_call_operand.vmem [shape: f32[4,32], index: 3, kind: input, shape index: {}]
  %s4 = inlined_call_operand.vmem [shape: f32[4,1], index: 4, kind: input, shape index: {}]
  %s5 = inlined_call_operand.hbm [shape: f32[2,4,256], index: 5, kind: output, shape index: {}]
  %s6 = sld [smem:[#allocation0]]
  $region53: #{tpu_custom_call.1} parent=0
    _
  %s8 = ssub.s32 1, %s6
  %s9 = scalar_select 0, %s8, %s6
  $region1: #{tpu_custom_call.1} parent=0
    #allocation2 [shape = 'u8[8192]{0}', space=vmem, size = 0x2000, scoped, tag = 'output window, operand 0']
    #allocation3 [shape = 's32[2]{0}', space=sflag, size = 0x8, scoped, tag = 'scoped memory for tpu_custom_call.1']
    %10 = vsyncpa [#allocation3], 0
    %s11 = scalar_lea.sflag [#allocation3], 1
    %12 = vsyncpa %s11, 0
    loop: start=0, step=1, limit=4
    $region2: #{tpu_custom_call.1} parent=1 // loop_pre_header
      _
    $region3: #{tpu_custom_call.1} parent=1 // loop_header
      %s14 = sphi 0, %s18
      %p15 = scmp.ge.s32.totalorder %s14, 4
      %s21 = sphi 0, %s33
      %s22 = sphi 0, %s29
      %s23 = sphi 0, %s21
      %s24 = sphi 0, %s22
      %s25 = sphi 0, %s23
      %s26 = sphi 0, %s24
      %s38 = sphi 0, %s40
      %s41 = sphi 0, %s38
      %s42 = sphi 0, %s41
      %s58 = sphi 0, %s42
      %s62 = sphi 0, %s62
      %s64 = sphi 0, %s62
      %s65 = sphi 0, %s64
      %s79 = sphi 0, %s65
      %s83 = sphi 0, %s83
      %s85 = sphi 0, %s83
      %s86 = sphi 0, %s85
      %s100 = sphi 0, %s86
      %s104 = sphi 0, %s104
      %s106 = sphi 0, %s104
      %s107 = sphi 0, %s106
      %s121 = sphi 0, %s107
      %s125 = sphi 0, %s125
      %s127 = sphi 0, %s125
      %s128 = sphi 0, %s127
      %s142 = sphi 0, %s128
      %s150 = sphi 0, %s152
      %s153 = sphi 0, %s150
      %s154 = sphi 0, %s153
      %s170 = sphi 0, %s154
    $region4: #{tpu_custom_call.1} parent=1 // loop_header_branch
      %17 = sbr.rel (%p15) target = $region8
    $region5: #{tpu_custom_call.1} parent=1 // loop_body
      %s19 = ssub.s32 %s14, 1
      %s20 = ssub.s32 %s14, 2
      %s27 = sadd.s32 1, %s22
      %p28 = scmp.ge.s32.totalorder %s27, 1
      %s29 = scalar_select %p28, 0, %s27
      %s30 = sadd.s32 1, %s21
      %s31 = scalar_select %p28, %s30, %s21
      %p32 = scmp.ge.s32.totalorder %s31, 2
      %s33 = scalar_select %p32, 0, %s31
      %s34 = ssub.s32 %s21, %s33
      %s35 = ssub.s32 %s22, %s29
      %s36 = sor.u32 %s34, %s35
      %p37 = scmp.eq.s32.totalorder %s36, 0
      %s39 = sadd.s32 %s38, 1
      %s40 = scalar_select %p37, %s38, %s39
      %p43 = pneg %p37
      %p44 = scmp.eq.s32.totalorder %s14, 1
      %p45 = por %p43, %p44
      %p46 = scmp.ne.s32.totalorder %s38, %s41
      %p47 = scmp.eq.s32.totalorder %s14, 0
      %p48 = por %p46, %p47
      %p49 = scmp.ne.s32.totalorder %s38, %s41
      %p50 = scmp.eq.s32.totalorder %s19, 1
      %p51 = por %p49, %p50
      %p52 = scmp.ne.s32.totalorder %s41, %s42
      %p53 = scmp.eq.s32.totalorder %s19, 0
      %p54 = por %p52, %p53
      %p55 = scmp.ne.s32.totalorder %s41, %s42
      %p56 = scmp.eq.s32.totalorder %s20, 1
      %p57 = por %p55, %p56
      %p59 = scmp.ne.s32.totalorder %s42, %s58
      %p60 = scmp.eq.s32.totalorder %s20, 0
      %p61 = por %p59, %p60
      %s63 = sadd.s32 %s62, 1
      %p66 = scmp.eq.s32.totalorder %s14, 1
      %p67 = scmp.ne.s32.totalorder %s62, %s64
      %p68 = scmp.eq.s32.totalorder %s14, 0
      %p69 = por %p67, %p68
      %p70 = scmp.ne.s32.totalorder %s62, %s64
      %p71 = scmp.eq.s32.totalorder %s19, 1
      %p72 = por %p70, %p71
      %p73 = scmp.ne.s32.totalorder %s64, %s65
      %p74 = scmp.eq.s32.totalorder %s19, 0
      %p75 = por %p73, %p74
      %p76 = scmp.ne.s32.totalorder %s64, %s65
      %p77 = scmp.eq.s32.totalorder %s20, 1
      %p78 = por %p76, %p77
      %p80 = scmp.ne.s32.totalorder %s65, %s79
      %p81 = scmp.eq.s32.totalorder %s20, 0
      %p82 = por %p80, %p81
      %s84 = sadd.s32 %s83, 1
      %p87 = scmp.eq.s32.totalorder %s14, 1
      %p88 = scmp.ne.s32.totalorder %s83, %s85
      %p89 = scmp.eq.s32.totalorder %s14, 0
      %p90 = por %p88, %p89
      %p91 = scmp.ne.s32.totalorder %s83, %s85
      %p92 = scmp.eq.s32.totalorder %s19, 1
      %p93 = por %p91, %p92
      %p94 = scmp.ne.s32.totalorder %s85, %s86
      %p95 = scmp.eq.s32.totalorder %s19, 0
      %p96 = por %p94, %p95
      %p97 = scmp.ne.s32.totalorder %s85, %s86
      %p98 = scmp.eq.s32.totalorder %s20, 1
      %p99 = por %p97, %p98
      %p101 = scmp.ne.s32.totalorder %s86, %s100
      %p102 = scmp.eq.s32.totalorder %s20, 0
      %p103 = por %p101, %p102
      %s105 = sadd.s32 %s104, 1
      %p108 = scmp.eq.s32.totalorder %s14, 1
      %p109 = scmp.ne.s32.totalorder %s104, %s106
      %p110 = scmp.eq.s32.totalorder %s14, 0
      %p111 = por %p109, %p110
      %p112 = scmp.ne.s32.totalorder %s104, %s106
      %p113 = scmp.eq.s32.totalorder %s19, 1
      %p114 = por %p112, %p113
      %p115 = scmp.ne.s32.totalorder %s106, %s107
      %p116 = scmp.eq.s32.totalorder %s19, 0
      %p117 = por %p115, %p116
      %p118 = scmp.ne.s32.totalorder %s106, %s107
      %p119 = scmp.eq.s32.totalorder %s20, 1
      %p120 = por %p118, %p119
      %p122 = scmp.ne.s32.totalorder %s107, %s121
      %p123 = scmp.eq.s32.totalorder %s20, 0
      %p124 = por %p122, %p123
      %s126 = sadd.s32 %s125, 1
      %p129 = scmp.eq.s32.totalorder %s14, 1
      %p130 = scmp.ne.s32.totalorder %s125, %s127
      %p131 = scmp.eq.s32.totalorder %s14, 0
      %p132 = por %p130, %p131
      %p133 = scmp.ne.s32.totalorder %s125, %s127
      %p134 = scmp.eq.s32.totalorder %s19, 1
      %p135 = por %p133, %p134
      %p136 = scmp.ne.s32.totalorder %s127, %s128
      %p137 = scmp.eq.s32.totalorder %s19, 0
      %p138 = por %p136, %p137
      %p139 = scmp.ne.s32.totalorder %s127, %s128
      %p140 = scmp.eq.s32.totalorder %s20, 1
      %p141 = por %p139, %p140
      %p143 = scmp.ne.s32.totalorder %s128, %s142
      %p144 = scmp.eq.s32.totalorder %s20, 0
      %p145 = por %p143, %p144
      %s146 = ssub.s32 %s21, %s33
      %s147 = ssub.s32 %s22, %s29
      %s148 = sor.u32 %s146, %s147
      %p149 = scmp.eq.s32.totalorder %s148, 0
      %s151 = sadd.s32 %s150, 1
      %s152 = scalar_select %p149, %s150, %s151
      %p155 = pneg %p149
      %p156 = scmp.eq.s32.totalorder %s14, 1
      %p157 = por %p155, %p156
      %p158 = scmp.ne.s32.totalorder %s150, %s153
      %p159 = scmp.eq.s32.totalorder %s14, 0
      %p160 = por %p158, %p159
      %p161 = scmp.ne.s32.totalorder %s150, %s153
      %p162 = scmp.eq.s32.totalorder %s19, 1
      %p163 = por %p161, %p162
      %p164 = scmp.ne.s32.totalorder %s153, %s154
      %p165 = scmp.eq.s32.totalorder %s19, 0
      %p166 = por %p164, %p165
      %p167 = scmp.ne.s32.totalorder %s153, %s154
      %p168 = scmp.eq.s32.totalorder %s20, 1
      %p169 = por %p167, %p168
      %p171 = scmp.ne.s32.totalorder %s154, %s170
      %p172 = scmp.eq.s32.totalorder %s20, 0
      %p173 = por %p171, %p172
      %p174 = scmp.le.s32.totalorder 1, %s14
      %p175 = scmp.lt.s32.totalorder %s14, 3
      %p176 = pnand %p174, %p175
      %p177 = pneg %p176
      // Predicated region
      $region9: #{tpu_custom_call.1} parent=5 // pred_check
        _
      $region10: #{tpu_custom_call.1} parent=5 // pred_check_branch
        %179 = sbr.rel (%p176) target = $region12
      $region11: #{tpu_custom_call.1} parent=5 // pred_region
        %s180 = ssub.s32 %s14, 1
        // Predicated region
        $region13: #{tpu_custom_call.1} parent=11 // pred_check
          %p181 = pneg %p75
        $region14: #{tpu_custom_call.1} parent=11 // pred_check_branch
          %183 = sbr.rel (%p181) target = $region16
        $region15: #{tpu_custom_call.1} parent=11 // pred_region
          _
        $region16: #{tpu_custom_call.1} parent=11 // pred_fallthru
          _
        // Predicated region
        $region17: #{tpu_custom_call.1} parent=11 // pred_check
          %p184 = pneg %p96
        $region18: #{tpu_custom_call.1} parent=11 // pred_check_branch
          %186 = sbr.rel (%p184) target = $region20
        $region19: #{tpu_custom_call.1} parent=11 // pred_region
          _
        $region20: #{tpu_custom_call.1} parent=11 // pred_fallthru
          _
        // Predicated region
        $region21: #{tpu_custom_call.1} parent=11 // pred_check
          %p187 = pneg %p117
        $region22: #{tpu_custom_call.1} parent=11 // pred_check_branch
          %189 = sbr.rel (%p187) target = $region24
        $region23: #{tpu_custom_call.1} parent=11 // pred_region
          _
        $region24: #{tpu_custom_call.1} parent=11 // pred_fallthru
          _
        // Predicated region
        $region25: #{tpu_custom_call.1} parent=11 // pred_check
          %p190 = pneg %p138
        $region26: #{tpu_custom_call.1} parent=11 // pred_check_branch
          %192 = sbr.rel (%p190) target = $region28
        $region27: #{tpu_custom_call.1} parent=11 // pred_region
          _
        $region28: #{tpu_custom_call.1} parent=11 // pred_fallthru
          _
      $region12: #{tpu_custom_call.1} parent=5 // pred_fallthru
        _
      %p193 = scmp.lt.s32.totalorder %s14, 2
      // Predicated region
      $region29: #{tpu_custom_call.1} parent=5 // pred_check
        %p194 = pneg %p193
      $region30: #{tpu_custom_call.1} parent=5 // pred_check_branch
        %196 = sbr.rel (%p194) target = $region32
      $region31: #{tpu_custom_call.1} parent=5 // pred_region
        // Predicated region
        $region33: #{tpu_custom_call.1} parent=31 // pred_check
          %p197 = pneg %p48
        $region34: #{tpu_custom_call.1} parent=31 // pred_check_branch
          %199 = sbr.rel (%p197) target = $region36
        $region35: #{tpu_custom_call.1} parent=31 // pred_region
          %s200 = smul.u32 2, %s22
          %p201 = scmp.lt.s32.totalorder %s21, 1
          %s202 = scalar_select %p201, %s21, 1
          %p203 = scmp.lt.s32.totalorder %s200, 1
          %s204 = scalar_select %p203, %s200, 1
          %s205 = smul.addr %s202, 2
          %s206 = sadd.s32 %s204, %s205
          %s207 = smul.addr %s206, 4
          %s208 = scalar_lea.vmem %s0, %s207
          %s209 = smul.u32 2, %s22
        $region36: #{tpu_custom_call.1} parent=31 // pred_fallthru
          _
      $region32: #{tpu_custom_call.1} parent=5 // pred_fallthru
        _
      %p210 = scmp.le.s32.totalorder 1, %s14
      %p211 = scmp.lt.s32.totalorder %s14, 3
      %p212 = pnand %p210, %p211
      %p213 = pneg %p212
      // Predicated region
      $region37: #{tpu_custom_call.1} parent=5 // pred_check
        _
      $region38: #{tpu_custom_call.1} parent=5 // pred_check_branch
        %215 = sbr.rel (%p212) target = $region40
      $region39: #{tpu_custom_call.1} parent=5 // pred_region
        %s216 = ssub.s32 %s14, 1
        %s217 = smul.u32 2, %s24
        %p218 = scmp.lt.s32.totalorder %s23, 1
        %s219 = scalar_select %p218, %s23, 1
        %p220 = scmp.lt.s32.totalorder %s217, 1
        %s221 = scalar_select %p220, %s217, 1
        %s222 = smul.addr %s219, 2
        %s223 = sadd.s32 %s221, %s222
        %s224 = smul.addr %s223, 4
        %s225 = scalar_lea.vmem %s0, %s224
        %p226 = pneg %p54
        %p227 = pneg %p51
        %p228 = pneg %p75
        %p229 = pneg %p72
        %p230 = pneg %p96
        %p231 = pneg %p93
        %p232 = pneg %p117
        %p233 = pneg %p114
        %p234 = pneg %p138
        %p235 = pneg %p135
        %p236 = pneg %p166
        %p237 = pneg %p163
        %s238 = sand.u32 %s153, 1
        %s239 = scalar_lea.sflag [#allocation3], %s238
        %s240 = sand.u32 %s153, 1
        %s241 = smul.addr %s240, 8
        %s242 = scalar_lea.vmem [#allocation2], %s241
        %s243 = smul.u32 2, %s24
        %p244 = scmp.lt.s32.totalorder %s23, 1
        %s245 = scalar_select %p244, %s23, 1
        %p246 = scmp.lt.s32.totalorder %s243, 1
        %s247 = scalar_select %p246, %s243, 1
        %s248 = smul.addr %s245, 2
        %s249 = sadd.s32 %s247, %s248
        %s250 = smul.addr %s249, 4
        %s251 = scalar_lea.vmem %s0, %s250
        %s252 = smul.u32 2, %s24
        %s253 = smul.u32 2, %s24
        %v254 = vld [vmem:[%s251] sm:$0xff]
        %v255 = vld [vmem:[%s1] sm:$0xff]
        %v256 = vld [vmem:[%s1 + $0x8] sm:$0xff]
        %v257 = vld [vmem:[%s1 + $0x10] sm:$0xff]
        %v258 = vld [vmem:[%s1 + $0x18] sm:$0xff]
        %v259 = vld [vmem:[%s2] sm:$0xff]
        %v260 = vld [vmem:[%s2 + $0x8] sm:$0xff]
        %v261 = vld [vmem:[%s2 + $0x10] sm:$0xff]
        %v262 = vld [vmem:[%s2 + $0x18] sm:$0xff]
        %264 = vset.pattern.permute.xlu0 0
        %265 = vperm.xlu0 %264, %v259
        %v266 = vpop.permute.xlu0 %265
        %269 = vset.pattern.permute.xlu0 0
        %270 = vperm.xlu0 %269, %v260
        %v271 = vpop.permute.xlu0 %270
        %274 = vset.pattern.permute.xlu0 0
        %275 = vperm.xlu0 %274, %v261
        %v276 = vpop.permute.xlu0 %275
        %279 = vset.pattern.permute.xlu0 0
        %280 = vperm.xlu0 %279, %v262
        %v281 = vpop.permute.xlu0 %280
        %284 = vst [vmem:[#allocation1] ss:$2 sm:$0xff] %v254
        %v285 = vld.sshfl [vmem:[#allocation1] sm:$0xff pattern:$0x75316420]
        %v286 = vld.sshfl [vmem:[#allocation1 + $0x8] sm:$0xff pattern:$0x75316420]
        %vm287 = vcmask 31744
        %v289 = vsel %vm287, %v255, 0
        %v292 = vsel %vm287, %v256, 0
        %v295 = vsel %vm287, %v257, 0
        %v298 = vsel %vm287, %v258, 0
        %vm300 = vcmask 1043456
        %v301 = vsel %vm300, %v285, 0
        %v303 = vsel %vm300, %v286, 0
        %305 = vmatpush.msra.mxu0 0.0
        %306 = vmatpush.msra.mxu0 0.0
        %307 = vmatpush.msra.mxu0 0.0
        %308 = vmatpush.msra.mxu0 0.0
        %309 = vmatpush.msra.mxu0 0.0
        %310 = vmatpush.msra.mxu0 0.0
        %311 = vmatpush.msra.mxu0 0.0
        %312 = vmatpush.msra.mxu0 0.0
        %313 = vmatpush.msra.mxu0 0.0
        %314 = vmatpush.msra.mxu0 0.0
        %315 = vmatpush.msra.mxu0 0.0
        %316 = vmatpush.msra.mxu0 0.0
        %317 = vmatpush.msra.mxu0 0.0
        %318 = vmatpush.msra.mxu0 0.0
        %319 = vmatpush.msra.mxu0 0.0
        %320 = vmatpush.msra.mxu0 %v301
        %321 = vmatmul.f32.gmra.mxu0 %v289
        %v322 = vpop.f32.mrf.mxu0
        %v323 = vadd.f32 %v266, %v322
        %324 = vmatmul.f32.gmra.mxu0 %v292
        %v325 = vpop.f32.mrf.mxu0
        %v326 = vadd.f32 %v271, %v325
        %327 = vmatmul.f32.gmra.mxu0 %v295
        %v328 = vpop.f32.mrf.mxu0
        %v329 = vadd.f32 %v276, %v328
        %330 = vmatmul.f32.gmra.mxu0 %v298
        %v331 = vpop.f32.mrf.mxu0
        %v332 = vadd.f32 %v281, %v331
        %333 = vdwg.mxu0
        %334 = vmatpush.msra.mxu0 0.0
        %335 = vmatpush.msra.mxu0 0.0
        %336 = vmatpush.msra.mxu0 0.0
        %337 = vmatpush.msra.mxu0 0.0
        %338 = vmatpush.msra.mxu0 0.0
        %339 = vmatpush.msra.mxu0 0.0
        %340 = vmatpush.msra.mxu0 0.0
        %341 = vmatpush.msra.mxu0 0.0
        %342 = vmatpush.msra.mxu0 0.0
        %343 = vmatpush.msra.mxu0 0.0
        %344 = vmatpush.msra.mxu0 0.0
        %345 = vmatpush.msra.mxu0 0.0
        %346 = vmatpush.msra.mxu0 0.0
        %347 = vmatpush.msra.mxu0 0.0
        %348 = vmatpush.msra.mxu0 0.0
        %349 = vmatpush.msra.mxu0 %v303
        %350 = vmatmul.f32.gmra.mxu0 %v289
        %v351 = vpop.f32.mrf.mxu0
        %v352 = vadd.f32 %v266, %v351
        %353 = vmatmul.f32.gmra.mxu0 %v292
        %v354 = vpop.f32.mrf.mxu0
        %v355 = vadd.f32 %v271, %v354
        %356 = vmatmul.f32.gmra.mxu0 %v295
        %v357 = vpop.f32.mrf.mxu0
        %v358 = vadd.f32 %v276, %v357
        %359 = vmatmul.f32.gmra.mxu0 %v298
        %v360 = vpop.f32.mrf.mxu0
        %v361 = vadd.f32 %v281, %v360
        %362 = vdwg.mxu0
        %v363 = vmul.f32 %v323, 0.5
        %v364 = vmul.f32 %v352, 0.5
        %v365 = vmul.f32 %v326, 0.5
        %v366 = vmul.f32 %v355, 0.5
        %v367 = vmul.f32 %v329, 0.5
        %v368 = vmul.f32 %v358, 0.5
        %v369 = vmul.f32 %v332, 0.5
        %v370 = vmul.f32 %v361, 0.5
        %v371 = vmul.f32 %v323, 0.70710677
        %v372 = vmul.f32 %v352, 0.70710677
        %v373 = vmul.f32 %v326, 0.70710677
        %v374 = vmul.f32 %v355, 0.70710677
        %v375 = vmul.f32 %v329, 0.70710677
        %v376 = vmul.f32 %v358, 0.70710677
        %v377 = vmul.f32 %v332, 0.70710677
        %v378 = vmul.f32 %v361, 0.70710677
        %v379 = vmul.f32 %v371, %v371
        %v380 = vmin.f32 16.0, %v379
        %v381 = vmul.f32 %v380, 2.1237322e-06
        %v382 = vadd.f32 %v381, 0.00028619796
        %v383 = vmul.f32 %v380, %v382
        %v384 = vadd.f32 %v383, 0.0036580483
        %v385 = vmul.f32 %v380, %v384
        %v386 = vadd.f32 %v385, 0.05243302
        %v387 = vmul.f32 %v380, %v386
        %v388 = vadd.f32 %v387, 0.18741608
        %v389 = vmul.f32 %v380, %v388
        %v390 = vadd.f32 %v389, 1.1283791
        %v391 = vmul.f32 %v371, %v390
        %v392 = vmul.f32 %v380, 3.8918573e-05
        %v393 = vadd.f32 %v392, 0.001143296
        %v394 = vmul.f32 %v380, %v393
        %v395 = vadd.f32 %v394, 0.014752088
        %v396 = vmul.f32 %v380, %v395
        %v397 = vadd.f32 %v396, 0.112945676
        %v398 = vmul.f32 %v380, %v397
        %v399 = vadd.f32 %v398, 0.4994258
        %v400 = vmul.f32 %v380, %v399
        %v401 = vadd.f32 %v400, 1.0
        %v402 = vrcp.pop %v401
        %v403 = vmul.f32 %v401, %v402
        %v404 = vsub.f32 1.0, %v403
        %v405 = vmul.f32 %v402, %v404
        %v406 = vadd.f32 %v402, %v405
        %vm407 = vweird.f32 %v401
        %vm408 = vweird.f32 %v402
        %vm409 = vmor %vm407, %vm408
        %v410 = vsel %vm409, %v402, %v406
        %v411 = vand.u32 2147483647, %v401
        %vm412 = vcmp.eq.f32.partialorder %v411, 8.507059e+37
        %v413 = vand.u32 %v401, 2147483648
        %v414 = vor.u32 1.1754944e-38, %v413
        %v415 = vsel %vm412, %v414, %v410
        %v416 = vmul.f32 %v391, %v415
        %v417 = vmin.f32 %v416, 1.0
        %v418 = vmax.f32 %v417, -1.0
        %v419 = vmul.f32 %v372, %v372
        %v420 = vmin.f32 16.0, %v419
        %v421 = vmul.f32 %v420, 2.1237322e-06
        %v422 = vadd.f32 %v421, 0.00028619796
        %v423 = vmul.f32 %v420, %v422
        %v424 = vadd.f32 %v423, 0.0036580483
        %v425 = vmul.f32 %v420, %v424
        %v426 = vadd.f32 %v425, 0.05243302
        %v427 = vmul.f32 %v420, %v426
        %v428 = vadd.f32 %v427, 0.18741608
        %v429 = vmul.f32 %v420, %v428
        %v430 = vadd.f32 %v429, 1.1283791
        %v431 = vmul.f32 %v372, %v430
        %v432 = vmul.f32 %v420, 3.8918573e-05
        %v433 = vadd.f32 %v432, 0.001143296
        %v434 = vmul.f32 %v420, %v433
        %v435 = vadd.f32 %v434, 0.014752088
        %v436 = vmul.f32 %v420, %v435
        %v437 = vadd.f32 %v436, 0.112945676
        %v438 = vmul.f32 %v420, %v437
        %v439 = vadd.f32 %v438, 0.4994258
        %v440 = vmul.f32 %v420, %v439
        %v441 = vadd.f32 %v440, 1.0
        %v442 = vrcp.pop %v441
        %v443 = vmul.f32 %v441, %v442
        %v444 = vsub.f32 1.0, %v443
        %v445 = vmul.f32 %v442, %v444
        %v446 = vadd.f32 %v442, %v445
        %vm447 = vweird.f32 %v441
        %vm448 = vweird.f32 %v442
        %vm449 = vmor %vm447, %vm448
        %v450 = vsel %vm449, %v442, %v446
        %v451 = vand.u32 2147483647, %v441
        %vm452 = vcmp.eq.f32.partialorder %v451, 8.507059e+37
        %v453 = vand.u32 %v441, 2147483648
        %v454 = vor.u32 1.1754944e-38, %v453
        %v455 = vsel %vm452, %v454, %v450
        %v456 = vmul.f32 %v431, %v455
        %v457 = vmin.f32 %v456, 1.0
        %v458 = vmax.f32 %v457, -1.0
        %v459 = vmul.f32 %v373, %v373
        %v460 = vmin.f32 16.0, %v459
        %v461 = vmul.f32 %v460, 2.1237322e-06
        %v462 = vadd.f32 %v461, 0.00028619796
        %v463 = vmul.f32 %v460, %v462
        %v464 = vadd.f32 %v463, 0.0036580483
        %v465 = vmul.f32 %v460, %v464
        %v466 = vadd.f32 %v465, 0.05243302
        %v467 = vmul.f32 %v460, %v466
        %v468 = vadd.f32 %v467, 0.18741608
        %v469 = vmul.f32 %v460, %v468
        %v470 = vadd.f32 %v469, 1.1283791
        %v471 = vmul.f32 %v373, %v470
        %v472 = vmul.f32 %v460, 3.8918573e-05
        %v473 = vadd.f32 %v472, 0.001143296
        %v474 = vmul.f32 %v460, %v473
        %v475 = vadd.f32 %v474, 0.014752088
        %v476 = vmul.f32 %v460, %v475
        %v477 = vadd.f32 %v476, 0.112945676
        %v478 = vmul.f32 %v460, %v477
        %v479 = vadd.f32 %v478, 0.4994258
        %v480 = vmul.f32 %v460, %v479
        %v481 = vadd.f32 %v480, 1.0
        %v482 = vrcp.pop %v481
        %v483 = vmul.f32 %v481, %v482
        %v484 = vsub.f32 1.0, %v483
        %v485 = vmul.f32 %v482, %v484
        %v486 = vadd.f32 %v482, %v485
        %vm487 = vweird.f32 %v481
        %vm488 = vweird.f32 %v482
        %vm489 = vmor %vm487, %vm488
        %v490 = vsel %vm489, %v482, %v486
        %v491 = vand.u32 2147483647, %v481
        %vm492 = vcmp.eq.f32.partialorder %v491, 8.507059e+37
        %v493 = vand.u32 %v481, 2147483648
        %v494 = vor.u32 1.1754944e-38, %v493
        %v495 = vsel %vm492, %v494, %v490
        %v496 = vmul.f32 %v471, %v495
        %v497 = vmin.f32 %v496, 1.0
        %v498 = vmax.f32 %v497, -1.0
        %v499 = vmul.f32 %v374, %v374
        %v500 = vmin.f32 16.0, %v499
        %v501 = vmul.f32 %v500, 2.1237322e-06
        %v502 = vadd.f32 %v501, 0.00028619796
        %v503 = vmul.f32 %v500, %v502
        %v504 = vadd.f32 %v503, 0.0036580483
        %v505 = vmul.f32 %v500, %v504
        %v506 = vadd.f32 %v505, 0.05243302
        %v507 = vmul.f32 %v500, %v506
        %v508 = vadd.f32 %v507, 0.18741608
        %v509 = vmul.f32 %v500, %v508
        %v510 = vadd.f32 %v509, 1.1283791
        %v511 = vmul.f32 %v374, %v510
        %v512 = vmul.f32 %v500, 3.8918573e-05
        %v513 = vadd.f32 %v512, 0.001143296
        %v514 = vmul.f32 %v500, %v513
        %v515 = vadd.f32 %v514, 0.014752088
        %v516 = vmul.f32 %v500, %v515
        %v517 = vadd.f32 %v516, 0.112945676
        %v518 = vmul.f32 %v500, %v517
        %v519 = vadd.f32 %v518, 0.4994258
        %v520 = vmul.f32 %v500, %v519
        %v521 = vadd.f32 %v520, 1.0
        %v522 = vrcp.pop %v521
        %v523 = vmul.f32 %v521, %v522
        %v524 = vsub.f32 1.0, %v523
        %v525 = vmul.f32 %v522, %v524
        %v526 = vadd.f32 %v522, %v525
        %vm527 = vweird.f32 %v521
        %vm528 = vweird.f32 %v522
        %vm529 = vmor %vm527, %vm528
        %v530 = vsel %vm529, %v522, %v526
        %v531 = vand.u32 2147483647, %v521
        %vm532 = vcmp.eq.f32.partialorder %v531, 8.507059e+37
        %v533 = vand.u32 %v521, 2147483648
        %v534 = vor.u32 1.1754944e-38, %v533
        %v535 = vsel %vm532, %v534, %v530
        %v536 = vmul.f32 %v511, %v535
        %v537 = vmin.f32 %v536, 1.0
        %v538 = vmax.f32 %v537, -1.0
        %v539 = vmul.f32 %v375, %v375
        %v540 = vmin.f32 16.0, %v539
        %v541 = vmul.f32 %v540, 2.1237322e-06
        %v542 = vadd.f32 %v541, 0.00028619796
        %v543 = vmul.f32 %v540, %v542
        %v544 = vadd.f32 %v543, 0.0036580483
        %v545 = vmul.f32 %v540, %v544
        %v546 = vadd.f32 %v545, 0.05243302
        %v547 = vmul.f32 %v540, %v546
        %v548 = vadd.f32 %v547, 0.18741608
        %v549 = vmul.f32 %v540, %v548
        %v550 = vadd.f32 %v549, 1.1283791
        %v551 = vmul.f32 %v375, %v550
        %v552 = vmul.f32 %v540, 3.8918573e-05
        %v553 = vadd.f32 %v552, 0.001143296
        %v554 = vmul.f32 %v540, %v553
        %v555 = vadd.f32 %v554, 0.014752088
        %v556 = vmul.f32 %v540, %v555
        %v557 = vadd.f32 %v556, 0.112945676
        %v558 = vmul.f32 %v540, %v557
        %v559 = vadd.f32 %v558, 0.4994258
        %v560 = vmul.f32 %v540, %v559
        %v561 = vadd.f32 %v560, 1.0
        %v562 = vrcp.pop %v561
        %v563 = vmul.f32 %v561, %v562
        %v564 = vsub.f32 1.0, %v563
        %v565 = vmul.f32 %v562, %v564
        %v566 = vadd.f32 %v562, %v565
        %vm567 = vweird.f32 %v561
        %vm568 = vweird.f32 %v562
        %vm569 = vmor %vm567, %vm568
        %v570 = vsel %vm569, %v562, %v566
        %v571 = vand.u32 2147483647, %v561
        %vm572 = vcmp.eq.f32.partialorder %v571, 8.507059e+37
        %v573 = vand.u32 %v561, 2147483648
        %v574 = vor.u32 1.1754944e-38, %v573
        %v575 = vsel %vm572, %v574, %v570
        %v576 = vmul.f32 %v551, %v575
        %v577 = vmin.f32 %v576, 1.0
        %v578 = vmax.f32 %v577, -1.0
        %v579 = vmul.f32 %v376, %v376
        %v580 = vmin.f32 16.0, %v579
        %v581 = vmul.f32 %v580, 2.1237322e-06
        %v582 = vadd.f32 %v581, 0.00028619796
        %v583 = vmul.f32 %v580, %v582
        %v584 = vadd.f32 %v583, 0.0036580483
        %v585 = vmul.f32 %v580, %v584
        %v586 = vadd.f32 %v585, 0.05243302
        %v587 = vmul.f32 %v580, %v586
        %v588 = vadd.f32 %v587, 0.18741608
        %v589 = vmul.f32 %v580, %v588
        %v590 = vadd.f32 %v589, 1.1283791
        %v591 = vmul.f32 %v376, %v590
        %v592 = vmul.f32 %v580, 3.8918573e-05
        %v593 = vadd.f32 %v592, 0.001143296
        %v594 = vmul.f32 %v580, %v593
        %v595 = vadd.f32 %v594, 0.014752088
        %v596 = vmul.f32 %v580, %v595
        %v597 = vadd.f32 %v596, 0.112945676
        %v598 = vmul.f32 %v580, %v597
        %v599 = vadd.f32 %v598, 0.4994258
        %v600 = vmul.f32 %v580, %v599
        %v601 = vadd.f32 %v600, 1.0
        %v602 = vrcp.pop %v601
        %v603 = vmul.f32 %v601, %v602
        %v604 = vsub.f32 1.0, %v603
        %v605 = vmul.f32 %v602, %v604
        %v606 = vadd.f32 %v602, %v605
        %vm607 = vweird.f32 %v601
        %vm608 = vweird.f32 %v602
        %vm609 = vmor %vm607, %vm608
        %v610 = vsel %vm609, %v602, %v606
        %v611 = vand.u32 2147483647, %v601
        %vm612 = vcmp.eq.f32.partialorder %v611, 8.507059e+37
        %v613 = vand.u32 %v601, 2147483648
        %v614 = vor.u32 1.1754944e-38, %v613
        %v615 = vsel %vm612, %v614, %v610
        %v616 = vmul.f32 %v591, %v615
        %v617 = vmin.f32 %v616, 1.0
        %v618 = vmax.f32 %v617, -1.0
        %v619 = vmul.f32 %v377, %v377
        %v620 = vmin.f32 16.0, %v619
        %v621 = vmul.f32 %v620, 2.1237322e-06
        %v622 = vadd.f32 %v621, 0.00028619796
        %v623 = vmul.f32 %v620, %v622
        %v624 = vadd.f32 %v623, 0.0036580483
        %v625 = vmul.f32 %v620, %v624
        %v626 = vadd.f32 %v625, 0.05243302
        %v627 = vmul.f32 %v620, %v626
        %v628 = vadd.f32 %v627, 0.18741608
        %v629 = vmul.f32 %v620, %v628
        %v630 = vadd.f32 %v629, 1.1283791
        %v631 = vmul.f32 %v377, %v630
        %v632 = vmul.f32 %v620, 3.8918573e-05
        %v633 = vadd.f32 %v632, 0.001143296
        %v634 = vmul.f32 %v620, %v633
        %v635 = vadd.f32 %v634, 0.014752088
        %v636 = vmul.f32 %v620, %v635
        %v637 = vadd.f32 %v636, 0.112945676
        %v638 = vmul.f32 %v620, %v637
        %v639 = vadd.f32 %v638, 0.4994258
        %v640 = vmul.f32 %v620, %v639
        %v641 = vadd.f32 %v640, 1.0
        %v642 = vrcp.pop %v641
        %v643 = vmul.f32 %v641, %v642
        %v644 = vsub.f32 1.0, %v643
        %v645 = vmul.f32 %v642, %v644
        %v646 = vadd.f32 %v642, %v645
        %vm647 = vweird.f32 %v641
        %vm648 = vweird.f32 %v642
        %vm649 = vmor %vm647, %vm648
        %v650 = vsel %vm649, %v642, %v646
        %v651 = vand.u32 2147483647, %v641
        %vm652 = vcmp.eq.f32.partialorder %v651, 8.507059e+37
        %v653 = vand.u32 %v641, 2147483648
        %v654 = vor.u32 1.1754944e-38, %v653
        %v655 = vsel %vm652, %v654, %v650
        %v656 = vmul.f32 %v631, %v655
        %v657 = vmin.f32 %v656, 1.0
        %v658 = vmax.f32 %v657, -1.0
        %v659 = vmul.f32 %v378, %v378
        %v660 = vmin.f32 16.0, %v659
        %v661 = vmul.f32 %v660, 2.1237322e-06
        %v662 = vadd.f32 %v661, 0.00028619796
        %v663 = vmul.f32 %v660, %v662
        %v664 = vadd.f32 %v663, 0.0036580483
        %v665 = vmul.f32 %v660, %v664
        %v666 = vadd.f32 %v665, 0.05243302
        %v667 = vmul.f32 %v660, %v666
        %v668 = vadd.f32 %v667, 0.18741608
        %v669 = vmul.f32 %v660, %v668
        %v670 = vadd.f32 %v669, 1.1283791
        %v671 = vmul.f32 %v378, %v670
        %v672 = vmul.f32 %v660, 3.8918573e-05
        %v673 = vadd.f32 %v672, 0.001143296
        %v674 = vmul.f32 %v660, %v673
        %v675 = vadd.f32 %v674, 0.014752088
        %v676 = vmul.f32 %v660, %v675
        %v677 = vadd.f32 %v676, 0.112945676
        %v678 = vmul.f32 %v660, %v677
        %v679 = vadd.f32 %v678, 0.4994258
        %v680 = vmul.f32 %v660, %v679
        %v681 = vadd.f32 %v680, 1.0
        %v682 = vrcp.pop %v681
        %v683 = vmul.f32 %v681, %v682
        %v684 = vsub.f32 1.0, %v683
        %v685 = vmul.f32 %v682, %v684
        %v686 = vadd.f32 %v682, %v685
        %vm687 = vweird.f32 %v681
        %vm688 = vweird.f32 %v682
        %vm689 = vmor %vm687, %vm688
        %v690 = vsel %vm689, %v682, %v686
        %v691 = vand.u32 2147483647, %v681
        %vm692 = vcmp.eq.f32.partialorder %v691, 8.507059e+37
        %v693 = vand.u32 %v681, 2147483648
        %v694 = vor.u32 1.1754944e-38, %v693
        %v695 = vsel %vm692, %v694, %v690
        %v696 = vmul.f32 %v671, %v695
        %v697 = vmin.f32 %v696, 1.0
        %v698 = vmax.f32 %v697, -1.0
        %v699 = vadd.f32 %v418, 1.0
        %v700 = vadd.f32 %v458, 1.0
        %v701 = vadd.f32 %v498, 1.0
        %v702 = vadd.f32 %v538, 1.0
        %v703 = vadd.f32 %v578, 1.0
        %v704 = vadd.f32 %v618, 1.0
        %v705 = vadd.f32 %v658, 1.0
        %v706 = vadd.f32 %v698, 1.0
        %v707 = vmul.f32 %v363, %v699
        %v708 = vmul.f32 %v364, %v700
        %v709 = vmul.f32 %v365, %v701
        %v710 = vmul.f32 %v366, %v702
        %v711 = vmul.f32 %v367, %v703
        %v712 = vmul.f32 %v368, %v704
        %v713 = vmul.f32 %v369, %v705
        %v714 = vmul.f32 %v370, %v706
        %v715 = vld [vmem:[%s3] sm:$0xf]
        %v716 = vld [vmem:[%s4] sm:$0xf]
        %718 = vset.pattern.permute.xlu0 0
        %719 = vperm.xlu0 %718, %v716
        %v720 = vpop.permute.xlu0 %719
        %vm722 = vcmask 261120
        %v724 = vsel %vm722, %v715, 0
        %726 = vmatpush.msra.mxu0 0.0
        %727 = vmatpush.msra.mxu0 0.0
        %728 = vmatpush.msra.mxu0 0.0
        %729 = vmatpush.msra.mxu0 0.0
        %730 = vmatpush.msra.mxu0 0.0
        %731 = vmatpush.msra.mxu0 0.0
        %732 = vmatpush.msra.mxu0 0.0
        %733 = vmatpush.msra.mxu0 0.0
        %734 = vmatpush.msra.mxu0 0.0
        %735 = vmatpush.msra.mxu0 0.0
        %736 = vmatpush.msra.mxu0 0.0
        %737 = vmatpush.msra.mxu0 0.0
        %738 = vmatpush.msra.mxu0 %v713
        %739 = vmatpush.msra.mxu0 %v711
        %740 = vmatpush.msra.mxu0 %v709
        %741 = vmatpush.msra.mxu0 %v707
        %742 = vmatmul.f32.gmra.mxu0 %v724
        %v743 = vpop.f32.mrf.mxu0
        %v744 = vadd.f32 %v720, %v743
        %745 = vdwg.mxu0
        %746 = vmatpush.msra.mxu0 0.0
        %747 = vmatpush.msra.mxu0 0.0
        %748 = vmatpush.msra.mxu0 0.0
        %749 = vmatpush.msra.mxu0 0.0
        %750 = vmatpush.msra.mxu0 0.0
        %751 = vmatpush.msra.mxu0 0.0
        %752 = vmatpush.msra.mxu0 0.0
        %753 = vmatpush.msra.mxu0 0.0
        %754 = vmatpush.msra.mxu0 0.0
        %755 = vmatpush.msra.mxu0 0.0
        %756 = vmatpush.msra.mxu0 0.0
        %757 = vmatpush.msra.mxu0 0.0
        %758 = vmatpush.msra.mxu0 %v714
        %759 = vmatpush.msra.mxu0 %v712
        %760 = vmatpush.msra.mxu0 %v710
        %761 = vmatpush.msra.mxu0 %v708
        %762 = vmatmul.f32.gmra.mxu0 %v724
        %v763 = vpop.f32.mrf.mxu0
        %v764 = vadd.f32 %v720, %v763
        %765 = vdwg.mxu0
        %v768 = vrot.slane %v764, 4
        %v769 = vsel %vm300, %v744, %v768
        %771 = vst [vmem:[%s242] sm:$0xff] %v769
        %s772 = sand.u32 %s153, 1
        %s773 = scalar_lea.sflag [#allocation3], %s772
        %s774 = sand.u32 %s153, 1
        %s775 = smul.addr %s774, 8
        %s776 = scalar_lea.vmem [#allocation2], %s775
        // Predicated region
        $region41: #{tpu_custom_call.1} parent=39 // pred_check
          %p777 = pneg %p163
        $region42: #{tpu_custom_call.1} parent=39 // pred_check_branch
          %779 = sbr.rel (%p777) target = $region44
        $region43: #{tpu_custom_call.1} parent=39 // pred_region
          %s780 = smul.u32 2, %s24
          %782 = vsyncadd %s773, 0
          %s783 = smul.addr %s23, 2
          %s784 = sadd.s32 %s780, %s783
          %s785 = smul.addr %s784, 4
          %s786 = scalar_lea.hbm %s5, %s785
          %s788 = sshll.u32 %s776, 4
          %s789 = int_to_ptr.vmem [resolvable:$true] %s788
          %s790 = sshll.u32 %s786, 4
          %s791 = int_to_ptr.hbm [resolvable:$true] %s790
          %793 = dma.vmem_to_hbm [thread:$0]  %s789, 128, %s791, %s773
        $region44: #{tpu_custom_call.1} parent=39 // pred_fallthru
          _
      $region40: #{tpu_custom_call.1} parent=5 // pred_fallthru
        _
      %p794 = scmp.le.s32.totalorder 2, %s14
      // Predicated region
      $region45: #{tpu_custom_call.1} parent=5 // pred_check
        %p795 = pneg %p794
      $region46: #{tpu_custom_call.1} parent=5 // pred_check_branch
        %797 = sbr.rel (%p795) target = $region48
      $region47: #{tpu_custom_call.1} parent=5 // pred_region
        %s798 = ssub.s32 %s14, 2
        // Predicated region
        $region49: #{tpu_custom_call.1} parent=47 // pred_check
          %p799 = pneg %p169
        $region50: #{tpu_custom_call.1} parent=47 // pred_check_branch
          %801 = sbr.rel (%p799) target = $region52
        $region51: #{tpu_custom_call.1} parent=47 // pred_region
          %s802 = sand.u32 %s154, 1
          %s803 = scalar_lea.sflag [#allocation3], %s802
          %s804 = sand.u32 %s154, 1
          %s805 = smul.addr %s804, 8
          %s806 = scalar_lea.vmem [#allocation2], %s805
          %808 = dma.done %s803, 128
        $region52: #{tpu_custom_call.1} parent=47 // pred_fallthru
          _
      $region48: #{tpu_custom_call.1} parent=5 // pred_fallthru
        _
    $region6: #{tpu_custom_call.1} parent=1 // loop_footer
      %s18 = sadd.s32 1, %s14
    $region7: #{tpu_custom_call.1} parent=1 // loop_footer_branch
      %13 = sbr.rel target = $region3
    $region8: #{tpu_custom_call.1} parent=1 // loop_exit
      _
    %809 = vsyncpa [#allocation3], 1
    %s810 = scalar_lea.sflag [#allocation3], 1
    %811 = vsyncpa %s810, 1

// kernel: tpu_custom_call.1
$region0: #{tpu_custom_call.1}
  #allocation0 [shape = 'u32[]', space=smem, size = 0x4, offset = 0x4, fixed_abs, tag = 'smem constant byte address 0x4 - core index']
  #allocation1 [shape = 'u32[72,128]{1,0:T(1,128)}', space=vmem, size = 0x9000, scoped, tag = 'internal scratch']
  %s0 = inlined_call_operand.vmem [shape: f32[2,4,256], index: 0, kind: input, shape index: {}]
  %s1 = inlined_call_operand.vmem [shape: f32[32,4], index: 1, kind: input, shape index: {}]
  %s2 = inlined_call_operand.vmem [shape: f32[32,1], index: 2, kind: input, shape index: {}]
  %s3 = inlined_call_operand.vmem [shape: f32[4,32], index: 3, kind: input, shape index: {}]
  %s4 = inlined_call_operand.vmem [shape: f32[4,1], index: 4, kind: input, shape index: {}]
  %s5 = inlined_call_operand.hbm [shape: f32[2,4,256], index: 5, kind: output, shape index: {}]
  %s6 = sld [smem:[#allocation0]]
  $region53: #{tpu_custom_call.1} parent=0
    _
  %s8 = ssub.s32 1, %s6
  %s9 = scalar_select 0, %s8, %s6
  $region1: #{tpu_custom_call.1} parent=0
    #allocation2 [shape = 'u8[8192]{0}', space=vmem, size = 0x2000, scoped, tag = 'output window, operand 0']
    #allocation3 [shape = 's32[2]{0}', space=sflag, size = 0x8, scoped, tag = 'scoped memory for tpu_custom_call.1']
    %10 = vsyncpa [#allocation3], 0
    %s11 = scalar_lea.sflag [#allocation3], 1
    %12 = vsyncpa %s11, 0
    loop: start=0, step=1, limit=4
    $region2: #{tpu_custom_call.1} parent=1 // loop_pre_header
      _
    $region3: #{tpu_custom_call.1} parent=1 // loop_header
      %s14 = sphi 0, %s18
      %p15 = scmp.ge.s32.totalorder %s14, 4
      %s21 = sphi 0, %s33
      %s22 = sphi 0, %s29
      %s23 = sphi 0, %s21
      %s24 = sphi 0, %s22
      %s25 = sphi 0, %s23
      %s26 = sphi 0, %s24
      %s38 = sphi 0, %s40
      %s41 = sphi 0, %s38
      %s42 = sphi 0, %s41
      %s58 = sphi 0, %s42
      %s62 = sphi 0, %s62
      %s64 = sphi 0, %s62
      %s65 = sphi 0, %s64
      %s79 = sphi 0, %s65
      %s83 = sphi 0, %s83
      %s85 = sphi 0, %s83
      %s86 = sphi 0, %s85
      %s100 = sphi 0, %s86
      %s104 = sphi 0, %s104
      %s106 = sphi 0, %s104
      %s107 = sphi 0, %s106
      %s121 = sphi 0, %s107
      %s125 = sphi 0, %s125
      %s127 = sphi 0, %s125
      %s128 = sphi 0, %s127
      %s142 = sphi 0, %s128
      %s150 = sphi 0, %s152
      %s153 = sphi 0, %s150
      %s154 = sphi 0, %s153
      %s170 = sphi 0, %s154
    $region4: #{tpu_custom_call.1} parent=1 // loop_header_branch
      %17 = sbr.rel (%p15) target = $region8
    $region5: #{tpu_custom_call.1} parent=1 // loop_body
      %s19 = ssub.s32 %s14, 1
      %s20 = ssub.s32 %s14, 2
      %s27 = sadd.s32 1, %s22
      %p28 = scmp.ge.s32.totalorder %s27, 1
      %s29 = scalar_select %p28, 0, %s27
      %s30 = sadd.s32 1, %s21
      %s31 = scalar_select %p28, %s30, %s21
      %p32 = scmp.ge.s32.totalorder %s31, 2
      %s33 = scalar_select %p32, 0, %s31
      %s34 = ssub.s32 %s21, %s33
      %s35 = ssub.s32 %s22, %s29
      %s36 = sor.u32 %s34, %s35
      %p37 = scmp.eq.s32.totalorder %s36, 0
      %s39 = sadd.s32 %s38, 1
      %s40 = scalar_select %p37, %s38, %s39
      %p43 = pneg %p37
      %p44 = scmp.eq.s32.totalorder %s14, 1
      %p45 = por %p43, %p44
      %p46 = scmp.ne.s32.totalorder %s38, %s41
      %p47 = scmp.eq.s32.totalorder %s14, 0
      %p48 = por %p46, %p47
      %p49 = scmp.ne.s32.totalorder %s38, %s41
      %p50 = scmp.eq.s32.totalorder %s19, 1
      %p51 = por %p49, %p50
      %p52 = scmp.ne.s32.totalorder %s41, %s42
      %p53 = scmp.eq.s32.totalorder %s19, 0
      %p54 = por %p52, %p53
      %p55 = scmp.ne.s32.totalorder %s41, %s42
      %p56 = scmp.eq.s32.totalorder %s20, 1
      %p57 = por %p55, %p56
      %p59 = scmp.ne.s32.totalorder %s42, %s58
      %p60 = scmp.eq.s32.totalorder %s20, 0
      %p61 = por %p59, %p60
      %s63 = sadd.s32 %s62, 1
      %p66 = scmp.eq.s32.totalorder %s14, 1
      %p67 = scmp.ne.s32.totalorder %s62, %s64
      %p68 = scmp.eq.s32.totalorder %s14, 0
      %p69 = por %p67, %p68
      %p70 = scmp.ne.s32.totalorder %s62, %s64
      %p71 = scmp.eq.s32.totalorder %s19, 1
      %p72 = por %p70, %p71
      %p73 = scmp.ne.s32.totalorder %s64, %s65
      %p74 = scmp.eq.s32.totalorder %s19, 0
      %p75 = por %p73, %p74
      %p76 = scmp.ne.s32.totalorder %s64, %s65
      %p77 = scmp.eq.s32.totalorder %s20, 1
      %p78 = por %p76, %p77
      %p80 = scmp.ne.s32.totalorder %s65, %s79
      %p81 = scmp.eq.s32.totalorder %s20, 0
      %p82 = por %p80, %p81
      %s84 = sadd.s32 %s83, 1
      %p87 = scmp.eq.s32.totalorder %s14, 1
      %p88 = scmp.ne.s32.totalorder %s83, %s85
      %p89 = scmp.eq.s32.totalorder %s14, 0
      %p90 = por %p88, %p89
      %p91 = scmp.ne.s32.totalorder %s83, %s85
      %p92 = scmp.eq.s32.totalorder %s19, 1
      %p93 = por %p91, %p92
      %p94 = scmp.ne.s32.totalorder %s85, %s86
      %p95 = scmp.eq.s32.totalorder %s19, 0
      %p96 = por %p94, %p95
      %p97 = scmp.ne.s32.totalorder %s85, %s86
      %p98 = scmp.eq.s32.totalorder %s20, 1
      %p99 = por %p97, %p98
      %p101 = scmp.ne.s32.totalorder %s86, %s100
      %p102 = scmp.eq.s32.totalorder %s20, 0
      %p103 = por %p101, %p102
      %s105 = sadd.s32 %s104, 1
      %p108 = scmp.eq.s32.totalorder %s14, 1
      %p109 = scmp.ne.s32.totalorder %s104, %s106
      %p110 = scmp.eq.s32.totalorder %s14, 0
      %p111 = por %p109, %p110
      %p112 = scmp.ne.s32.totalorder %s104, %s106
      %p113 = scmp.eq.s32.totalorder %s19, 1
      %p114 = por %p112, %p113
      %p115 = scmp.ne.s32.totalorder %s106, %s107
      %p116 = scmp.eq.s32.totalorder %s19, 0
      %p117 = por %p115, %p116
      %p118 = scmp.ne.s32.totalorder %s106, %s107
      %p119 = scmp.eq.s32.totalorder %s20, 1
      %p120 = por %p118, %p119
      %p122 = scmp.ne.s32.totalorder %s107, %s121
      %p123 = scmp.eq.s32.totalorder %s20, 0
      %p124 = por %p122, %p123
      %s126 = sadd.s32 %s125, 1
      %p129 = scmp.eq.s32.totalorder %s14, 1
      %p130 = scmp.ne.s32.totalorder %s125, %s127
      %p131 = scmp.eq.s32.totalorder %s14, 0
      %p132 = por %p130, %p131
      %p133 = scmp.ne.s32.totalorder %s125, %s127
      %p134 = scmp.eq.s32.totalorder %s19, 1
      %p135 = por %p133, %p134
      %p136 = scmp.ne.s32.totalorder %s127, %s128
      %p137 = scmp.eq.s32.totalorder %s19, 0
      %p138 = por %p136, %p137
      %p139 = scmp.ne.s32.totalorder %s127, %s128
      %p140 = scmp.eq.s32.totalorder %s20, 1
      %p141 = por %p139, %p140
      %p143 = scmp.ne.s32.totalorder %s128, %s142
      %p144 = scmp.eq.s32.totalorder %s20, 0
      %p145 = por %p143, %p144
      %s146 = ssub.s32 %s21, %s33
      %s147 = ssub.s32 %s22, %s29
      %s148 = sor.u32 %s146, %s147
      %p149 = scmp.eq.s32.totalorder %s148, 0
      %s151 = sadd.s32 %s150, 1
      %s152 = scalar_select %p149, %s150, %s151
      %p155 = pneg %p149
      %p156 = scmp.eq.s32.totalorder %s14, 1
      %p157 = por %p155, %p156
      %p158 = scmp.ne.s32.totalorder %s150, %s153
      %p159 = scmp.eq.s32.totalorder %s14, 0
      %p160 = por %p158, %p159
      %p161 = scmp.ne.s32.totalorder %s150, %s153
      %p162 = scmp.eq.s32.totalorder %s19, 1
      %p163 = por %p161, %p162
      %p164 = scmp.ne.s32.totalorder %s153, %s154
      %p165 = scmp.eq.s32.totalorder %s19, 0
      %p166 = por %p164, %p165
      %p167 = scmp.ne.s32.totalorder %s153, %s154
      %p168 = scmp.eq.s32.totalorder %s20, 1
      %p169 = por %p167, %p168
      %p171 = scmp.ne.s32.totalorder %s154, %s170
      %p172 = scmp.eq.s32.totalorder %s20, 0
      %p173 = por %p171, %p172
      %p174 = scmp.le.s32.totalorder 1, %s14
      %p175 = scmp.lt.s32.totalorder %s14, 3
      %p176 = pnand %p174, %p175
      %p177 = pneg %p176
      // Predicated region
      $region9: #{tpu_custom_call.1} parent=5 // pred_check
        _
      $region10: #{tpu_custom_call.1} parent=5 // pred_check_branch
        %179 = sbr.rel (%p176) target = $region12
      $region11: #{tpu_custom_call.1} parent=5 // pred_region
        %s180 = ssub.s32 %s14, 1
        // Predicated region
        $region13: #{tpu_custom_call.1} parent=11 // pred_check
          %p181 = pneg %p75
        $region14: #{tpu_custom_call.1} parent=11 // pred_check_branch
          %183 = sbr.rel (%p181) target = $region16
        $region15: #{tpu_custom_call.1} parent=11 // pred_region
          _
        $region16: #{tpu_custom_call.1} parent=11 // pred_fallthru
          _
        // Predicated region
        $region17: #{tpu_custom_call.1} parent=11 // pred_check
          %p184 = pneg %p96
        $region18: #{tpu_custom_call.1} parent=11 // pred_check_branch
          %186 = sbr.rel (%p184) target = $region20
        $region19: #{tpu_custom_call.1} parent=11 // pred_region
          _
        $region20: #{tpu_custom_call.1} parent=11 // pred_fallthru
          _
        // Predicated region
        $region21: #{tpu_custom_call.1} parent=11 // pred_check
          %p187 = pneg %p117
        $region22: #{tpu_custom_call.1} parent=11 // pred_check_branch
          %189 = sbr.rel (%p187) target = $region24
        $region23: #{tpu_custom_call.1} parent=11 // pred_region
          _
        $region24: #{tpu_custom_call.1} parent=11 // pred_fallthru
          _
        // Predicated region
        $region25: #{tpu_custom_call.1} parent=11 // pred_check
          %p190 = pneg %p138
        $region26: #{tpu_custom_call.1} parent=11 // pred_check_branch
          %192 = sbr.rel (%p190) target = $region28
        $region27: #{tpu_custom_call.1} parent=11 // pred_region
          _
        $region28: #{tpu_custom_call.1} parent=11 // pred_fallthru
          _
      $region12: #{tpu_custom_call.1} parent=5 // pred_fallthru
        _
      %p193 = scmp.lt.s32.totalorder %s14, 2
      // Predicated region
      $region29: #{tpu_custom_call.1} parent=5 // pred_check
        %p194 = pneg %p193
      $region30: #{tpu_custom_call.1} parent=5 // pred_check_branch
        %196 = sbr.rel (%p194) target = $region32
      $region31: #{tpu_custom_call.1} parent=5 // pred_region
        // Predicated region
        $region33: #{tpu_custom_call.1} parent=31 // pred_check
          %p197 = pneg %p48
        $region34: #{tpu_custom_call.1} parent=31 // pred_check_branch
          %199 = sbr.rel (%p197) target = $region36
        $region35: #{tpu_custom_call.1} parent=31 // pred_region
          %s200 = smul.u32 2, %s22
          %p201 = scmp.lt.s32.totalorder %s21, 1
          %s202 = scalar_select %p201, %s21, 1
          %p203 = scmp.lt.s32.totalorder %s200, 1
          %s204 = scalar_select %p203, %s200, 1
          %s205 = smul.addr %s202, 2
          %s206 = sadd.s32 %s204, %s205
          %s207 = smul.addr %s206, 4
          %s208 = scalar_lea.vmem %s0, %s207
          %s209 = smul.u32 2, %s22
        $region36: #{tpu_custom_call.1} parent=31 // pred_fallthru
          _
      $region32: #{tpu_custom_call.1} parent=5 // pred_fallthru
        _
      %p210 = scmp.le.s32.totalorder 1, %s14
      %p211 = scmp.lt.s32.totalorder %s14, 3
      %p212 = pnand %p210, %p211
      %p213 = pneg %p212
      // Predicated region
      $region37: #{tpu_custom_call.1} parent=5 // pred_check
        _
      $region38: #{tpu_custom_call.1} parent=5 // pred_check_branch
        %215 = sbr.rel (%p212) target = $region40
      $region39: #{tpu_custom_call.1} parent=5 // pred_region
        %s216 = ssub.s32 %s14, 1
        %s217 = smul.u32 2, %s24
        %p218 = scmp.lt.s32.totalorder %s23, 1
        %s219 = scalar_select %p218, %s23, 1
        %p220 = scmp.lt.s32.totalorder %s217, 1
        %s221 = scalar_select %p220, %s217, 1
        %s222 = smul.addr %s219, 2
        %s223 = sadd.s32 %s221, %s222
        %s224 = smul.addr %s223, 4
        %s225 = scalar_lea.vmem %s0, %s224
        %p226 = pneg %p54
        %p227 = pneg %p51
        %p228 = pneg %p75
        %p229 = pneg %p72
        %p230 = pneg %p96
        %p231 = pneg %p93
        %p232 = pneg %p117
        %p233 = pneg %p114
        %p234 = pneg %p138
        %p235 = pneg %p135
        %p236 = pneg %p166
        %p237 = pneg %p163
        %s238 = sand.u32 %s153, 1
        %s239 = scalar_lea.sflag [#allocation3], %s238
        %s240 = sand.u32 %s153, 1
        %s241 = smul.addr %s240, 8
        %s242 = scalar_lea.vmem [#allocation2], %s241
        %s243 = smul.u32 2, %s24
        %p244 = scmp.lt.s32.totalorder %s23, 1
        %s245 = scalar_select %p244, %s23, 1
        %p246 = scmp.lt.s32.totalorder %s243, 1
        %s247 = scalar_select %p246, %s243, 1
        %s248 = smul.addr %s245, 2
        %s249 = sadd.s32 %s247, %s248
        %s250 = smul.addr %s249, 4
        %s251 = scalar_lea.vmem %s0, %s250
        %s252 = smul.u32 2, %s24
        %s253 = smul.u32 2, %s24
        %v254 = vld [vmem:[%s251] sm:$0xff]
        %v255 = vld [vmem:[%s1] sm:$0xff]
        %v256 = vld [vmem:[%s1 + $0x8] sm:$0xff]
        %v257 = vld [vmem:[%s1 + $0x10] sm:$0xff]
        %v258 = vld [vmem:[%s1 + $0x18] sm:$0xff]
        %v259 = vld [vmem:[%s2] sm:$0xff]
        %v260 = vld [vmem:[%s2 + $0x8] sm:$0xff]
        %v261 = vld [vmem:[%s2 + $0x10] sm:$0xff]
        %v262 = vld [vmem:[%s2 + $0x18] sm:$0xff]
        %264 = vset.pattern.permute.xlu0 0
        %265 = vperm.xlu0 %264, %v259
        %v266 = vpop.permute.xlu0 %265
        %269 = vset.pattern.permute.xlu0 0
        %270 = vperm.xlu0 %269, %v260
        %v271 = vpop.permute.xlu0 %270
        %274 = vset.pattern.permute.xlu0 0
        %275 = vperm.xlu0 %274, %v261
        %v276 = vpop.permute.xlu0 %275
        %279 = vset.pattern.permute.xlu0 0
        %280 = vperm.xlu0 %279, %v262
        %v281 = vpop.permute.xlu0 %280
        %284 = vst [vmem:[#allocation1] ss:$2 sm:$0xff] %v254
        %v285 = vld.sshfl [vmem:[#allocation1] sm:$0xff pattern:$0x75316420]
        %v286 = vld.sshfl [vmem:[#allocation1 + $0x8] sm:$0xff pattern:$0x75316420]
        %vm287 = vcmask 31744
        %v289 = vsel %vm287, %v255, 0
        %v292 = vsel %vm287, %v256, 0
        %v295 = vsel %vm287, %v257, 0
        %v298 = vsel %vm287, %v258, 0
        %vm300 = vcmask 1043456
        %v301 = vsel %vm300, %v285, 0
        %v303 = vsel %vm300, %v286, 0
        %305 = vmatpush.msra.mxu0 0.0
        %306 = vmatpush.msra.mxu0 0.0
        %307 = vmatpush.msra.mxu0 0.0
        %308 = vmatpush.msra.mxu0 0.0
        %309 = vmatpush.msra.mxu0 0.0
        %310 = vmatpush.msra.mxu0 0.0
        %311 = vmatpush.msra.mxu0 0.0
        %312 = vmatpush.msra.mxu0 0.0
        %313 = vmatpush.msra.mxu0 0.0
        %314 = vmatpush.msra.mxu0 0.0
        %315 = vmatpush.msra.mxu0 0.0
        %316 = vmatpush.msra.mxu0 0.0
        %317 = vmatpush.msra.mxu0 0.0
        %318 = vmatpush.msra.mxu0 0.0
        %319 = vmatpush.msra.mxu0 0.0
        %320 = vmatpush.msra.mxu0 %v301
        %321 = vmatmul.f32.gmra.mxu0 %v289
        %v322 = vpop.f32.mrf.mxu0
        %v323 = vadd.f32 %v266, %v322
        %324 = vmatmul.f32.gmra.mxu0 %v292
        %v325 = vpop.f32.mrf.mxu0
        %v326 = vadd.f32 %v271, %v325
        %327 = vmatmul.f32.gmra.mxu0 %v295
        %v328 = vpop.f32.mrf.mxu0
        %v329 = vadd.f32 %v276, %v328
        %330 = vmatmul.f32.gmra.mxu0 %v298
        %v331 = vpop.f32.mrf.mxu0
        %v332 = vadd.f32 %v281, %v331
        %333 = vdwg.mxu0
        %334 = vmatpush.msra.mxu0 0.0
        %335 = vmatpush.msra.mxu0 0.0
        %336 = vmatpush.msra.mxu0 0.0
        %337 = vmatpush.msra.mxu0 0.0
        %338 = vmatpush.msra.mxu0 0.0
        %339 = vmatpush.msra.mxu0 0.0
        %340 = vmatpush.msra.mxu0 0.0
        %341 = vmatpush.msra.mxu0 0.0
        %342 = vmatpush.msra.mxu0 0.0
        %343 = vmatpush.msra.mxu0 0.0
        %344 = vmatpush.msra.mxu0 0.0
        %345 = vmatpush.msra.mxu0 0.0
        %346 = vmatpush.msra.mxu0 0.0
        %347 = vmatpush.msra.mxu0 0.0
        %348 = vmatpush.msra.mxu0 0.0
        %349 = vmatpush.msra.mxu0 %v303
        %350 = vmatmul.f32.gmra.mxu0 %v289
        %v351 = vpop.f32.mrf.mxu0
        %v352 = vadd.f32 %v266, %v351
        %353 = vmatmul.f32.gmra.mxu0 %v292
        %v354 = vpop.f32.mrf.mxu0
        %v355 = vadd.f32 %v271, %v354
        %356 = vmatmul.f32.gmra.mxu0 %v295
        %v357 = vpop.f32.mrf.mxu0
        %v358 = vadd.f32 %v276, %v357
        %359 = vmatmul.f32.gmra.mxu0 %v298
        %v360 = vpop.f32.mrf.mxu0
        %v361 = vadd.f32 %v281, %v360
        %362 = vdwg.mxu0
        %v363 = vmul.f32 %v323, 0.5
        %v364 = vmul.f32 %v352, 0.5
        %v365 = vmul.f32 %v326, 0.5
        %v366 = vmul.f32 %v355, 0.5
        %v367 = vmul.f32 %v329, 0.5
        %v368 = vmul.f32 %v358, 0.5
        %v369 = vmul.f32 %v332, 0.5
        %v370 = vmul.f32 %v361, 0.5
        %v371 = vmul.f32 %v323, 0.70710677
        %v372 = vmul.f32 %v352, 0.70710677
        %v373 = vmul.f32 %v326, 0.70710677
        %v374 = vmul.f32 %v355, 0.70710677
        %v375 = vmul.f32 %v329, 0.70710677
        %v376 = vmul.f32 %v358, 0.70710677
        %v377 = vmul.f32 %v332, 0.70710677
        %v378 = vmul.f32 %v361, 0.70710677
        %v379 = vmul.f32 %v371, %v371
        %v380 = vmin.f32 16.0, %v379
        %v381 = vmul.f32 %v380, 2.1237322e-06
        %v382 = vadd.f32 %v381, 0.00028619796
        %v383 = vmul.f32 %v380, %v382
        %v384 = vadd.f32 %v383, 0.0036580483
        %v385 = vmul.f32 %v380, %v384
        %v386 = vadd.f32 %v385, 0.05243302
        %v387 = vmul.f32 %v380, %v386
        %v388 = vadd.f32 %v387, 0.18741608
        %v389 = vmul.f32 %v380, %v388
        %v390 = vadd.f32 %v389, 1.1283791
        %v391 = vmul.f32 %v371, %v390
        %v392 = vmul.f32 %v380, 3.8918573e-05
        %v393 = vadd.f32 %v392, 0.001143296
        %v394 = vmul.f32 %v380, %v393
        %v395 = vadd.f32 %v394, 0.014752088
        %v396 = vmul.f32 %v380, %v395
        %v397 = vadd.f32 %v396, 0.112945676
        %v398 = vmul.f32 %v380, %v397
        %v399 = vadd.f32 %v398, 0.4994258
        %v400 = vmul.f32 %v380, %v399
        %v401 = vadd.f32 %v400, 1.0
        %v402 = vrcp.pop %v401
        %v403 = vmul.f32 %v401, %v402
        %v404 = vsub.f32 1.0, %v403
        %v405 = vmul.f32 %v402, %v404
        %v406 = vadd.f32 %v402, %v405
        %vm407 = vweird.f32 %v401
        %vm408 = vweird.f32 %v402
        %vm409 = vmor %vm407, %vm408
        %v410 = vsel %vm409, %v402, %v406
        %v411 = vand.u32 2147483647, %v401
        %vm412 = vcmp.eq.f32.partialorder %v411, 8.507059e+37
        %v413 = vand.u32 %v401, 2147483648
        %v414 = vor.u32 1.1754944e-38, %v413
        %v415 = vsel %vm412, %v414, %v410
        %v416 = vmul.f32 %v391, %v415
        %v417 = vmin.f32 %v416, 1.0
        %v418 = vmax.f32 %v417, -1.0
        %v419 = vmul.f32 %v372, %v372
        %v420 = vmin.f32 16.0, %v419
        %v421 = vmul.f32 %v420, 2.1237322e-06
        %v422 = vadd.f32 %v421, 0.00028619796
        %v423 = vmul.f32 %v420, %v422
        %v424 = vadd.f32 %v423, 0.0036580483
        %v425 = vmul.f32 %v420, %v424
        %v426 = vadd.f32 %v425, 0.05243302
        %v427 = vmul.f32 %v420, %v426
        %v428 = vadd.f32 %v427, 0.18741608
        %v429 = vmul.f32 %v420, %v428
        %v430 = vadd.f32 %v429, 1.1283791
        %v431 = vmul.f32 %v372, %v430
        %v432 = vmul.f32 %v420, 3.8918573e-05
        %v433 = vadd.f32 %v432, 0.001143296
        %v434 = vmul.f32 %v420, %v433
        %v435 = vadd.f32 %v434, 0.014752088
        %v436 = vmul.f32 %v420, %v435
        %v437 = vadd.f32 %v436, 0.112945676
        %v438 = vmul.f32 %v420, %v437
        %v439 = vadd.f32 %v438, 0.4994258
        %v440 = vmul.f32 %v420, %v439
        %v441 = vadd.f32 %v440, 1.0
        %v442 = vrcp.pop %v441
        %v443 = vmul.f32 %v441, %v442
        %v444 = vsub.f32 1.0, %v443
        %v445 = vmul.f32 %v442, %v444
        %v446 = vadd.f32 %v442, %v445
        %vm447 = vweird.f32 %v441
        %vm448 = vweird.f32 %v442
        %vm449 = vmor %vm447, %vm448
        %v450 = vsel %vm449, %v442, %v446
        %v451 = vand.u32 2147483647, %v441
        %vm452 = vcmp.eq.f32.partialorder %v451, 8.507059e+37
        %v453 = vand.u32 %v441, 2147483648
        %v454 = vor.u32 1.1754944e-38, %v453
        %v455 = vsel %vm452, %v454, %v450
        %v456 = vmul.f32 %v431, %v455
        %v457 = vmin.f32 %v456, 1.0
        %v458 = vmax.f32 %v457, -1.0
        %v459 = vmul.f32 %v373, %v373
        %v460 = vmin.f32 16.0, %v459
        %v461 = vmul.f32 %v460, 2.1237322e-06
        %v462 = vadd.f32 %v461, 0.00028619796
        %v463 = vmul.f32 %v460, %v462
        %v464 = vadd.f32 %v463, 0.0036580483
        %v465 = vmul.f32 %v460, %v464
        %v466 = vadd.f32 %v465, 0.05243302
        %v467 = vmul.f32 %v460, %v466
        %v468 = vadd.f32 %v467, 0.18741608
        %v469 = vmul.f32 %v460, %v468
        %v470 = vadd.f32 %v469, 1.1283791
        %v471 = vmul.f32 %v373, %v470
        %v472 = vmul.f32 %v460, 3.8918573e-05
        %v473 = vadd.f32 %v472, 0.001143296
        %v474 = vmul.f32 %v460, %v473
        %v475 = vadd.f32 %v474, 0.014752088
        %v476 = vmul.f32 %v460, %v475
        %v477 = vadd.f32 %v476, 0.112945676
        %v478 = vmul.f32 %v460, %v477
        %v479 = vadd.f32 %v478, 0.4994258
        %v480 = vmul.f32 %v460, %v479
        %v481 = vadd.f32 %v480, 1.0
        %v482 = vrcp.pop %v481
        %v483 = vmul.f32 %v481, %v482
        %v484 = vsub.f32 1.0, %v483
        %v485 = vmul.f32 %v482, %v484
        %v486 = vadd.f32 %v482, %v485
        %vm487 = vweird.f32 %v481
        %vm488 = vweird.f32 %v482
        %vm489 = vmor %vm487, %vm488
        %v490 = vsel %vm489, %v482, %v486
        %v491 = vand.u32 2147483647, %v481
        %vm492 = vcmp.eq.f32.partialorder %v491, 8.507059e+37
        %v493 = vand.u32 %v481, 2147483648
        %v494 = vor.u32 1.1754944e-38, %v493
        %v495 = vsel %vm492, %v494, %v490
        %v496 = vmul.f32 %v471, %v495
        %v497 = vmin.f32 %v496, 1.0
        %v498 = vmax.f32 %v497, -1.0
        %v499 = vmul.f32 %v374, %v374
        %v500 = vmin.f32 16.0, %v499
        %v501 = vmul.f32 %v500, 2.1237322e-06
        %v502 = vadd.f32 %v501, 0.00028619796
        %v503 = vmul.f32 %v500, %v502
        %v504 = vadd.f32 %v503, 0.0036580483
        %v505 = vmul.f32 %v500, %v504
        %v506 = vadd.f32 %v505, 0.05243302
        %v507 = vmul.f32 %v500, %v506
        %v508 = vadd.f32 %v507, 0.18741608
        %v509 = vmul.f32 %v500, %v508
        %v510 = vadd.f32 %v509, 1.1283791
        %v511 = vmul.f32 %v374, %v510
        %v512 = vmul.f32 %v500, 3.8918573e-05
        %v513 = vadd.f32 %v512, 0.001143296
        %v514 = vmul.f32 %v500, %v513
        %v515 = vadd.f32 %v514, 0.014752088
        %v516 = vmul.f32 %v500, %v515
        %v517 = vadd.f32 %v516, 0.112945676
        %v518 = vmul.f32 %v500, %v517
        %v519 = vadd.f32 %v518, 0.4994258
        %v520 = vmul.f32 %v500, %v519
        %v521 = vadd.f32 %v520, 1.0
        %v522 = vrcp.pop %v521
        %v523 = vmul.f32 %v521, %v522
        %v524 = vsub.f32 1.0, %v523
        %v525 = vmul.f32 %v522, %v524
        %v526 = vadd.f32 %v522, %v525
        %vm527 = vweird.f32 %v521
        %vm528 = vweird.f32 %v522
        %vm529 = vmor %vm527, %vm528
        %v530 = vsel %vm529, %v522, %v526
        %v531 = vand.u32 2147483647, %v521
        %vm532 = vcmp.eq.f32.partialorder %v531, 8.507059e+37
        %v533 = vand.u32 %v521, 2147483648
        %v534 = vor.u32 1.1754944e-38, %v533
        %v535 = vsel %vm532, %v534, %v530
        %v536 = vmul.f32 %v511, %v535
        %v537 = vmin.f32 %v536, 1.0
        %v538 = vmax.f32 %v537, -1.0
        %v539 = vmul.f32 %v375, %v375
        %v540 = vmin.f32 16.0, %v539
        %v541 = vmul.f32 %v540, 2.1237322e-06
        %v542 = vadd.f32 %v541, 0.00028619796
        %v543 = vmul.f32 %v540, %v542
        %v544 = vadd.f32 %v543, 0.0036580483
        %v545 = vmul.f32 %v540, %v544
        %v546 = vadd.f32 %v545, 0.05243302
        %v547 = vmul.f32 %v540, %v546
        %v548 = vadd.f32 %v547, 0.18741608
        %v549 = vmul.f32 %v540, %v548
        %v550 = vadd.f32 %v549, 1.1283791
        %v551 = vmul.f32 %v375, %v550
        %v552 = vmul.f32 %v540, 3.8918573e-05
        %v553 = vadd.f32 %v552, 0.001143296
        %v554 = vmul.f32 %v540, %v553
        %v555 = vadd.f32 %v554, 0.014752088
        %v556 = vmul.f32 %v540, %v555
        %v557 = vadd.f32 %v556, 0.112945676
        %v558 = vmul.f32 %v540, %v557
        %v559 = vadd.f32 %v558, 0.4994258
        %v560 = vmul.f32 %v540, %v559
        %v561 = vadd.f32 %v560, 1.0
        %v562 = vrcp.pop %v561
        %v563 = vmul.f32 %v561, %v562
        %v564 = vsub.f32 1.0, %v563
        %v565 = vmul.f32 %v562, %v564
        %v566 = vadd.f32 %v562, %v565
        %vm567 = vweird.f32 %v561
        %vm568 = vweird.f32 %v562
        %vm569 = vmor %vm567, %vm568
        %v570 = vsel %vm569, %v562, %v566
        %v571 = vand.u32 2147483647, %v561
        %vm572 = vcmp.eq.f32.partialorder %v571, 8.507059e+37
        %v573 = vand.u32 %v561, 2147483648
        %v574 = vor.u32 1.1754944e-38, %v573
        %v575 = vsel %vm572, %v574, %v570
        %v576 = vmul.f32 %v551, %v575
        %v577 = vmin.f32 %v576, 1.0
        %v578 = vmax.f32 %v577, -1.0
        %v579 = vmul.f32 %v376, %v376
        %v580 = vmin.f32 16.0, %v579
        %v581 = vmul.f32 %v580, 2.1237322e-06
        %v582 = vadd.f32 %v581, 0.00028619796
        %v583 = vmul.f32 %v580, %v582
        %v584 = vadd.f32 %v583, 0.0036580483
        %v585 = vmul.f32 %v580, %v584
        %v586 = vadd.f32 %v585, 0.05243302
        %v587 = vmul.f32 %v580, %v586
        %v588 = vadd.f32 %v587, 0.18741608
        %v589 = vmul.f32 %v580, %v588
        %v590 = vadd.f32 %v589, 1.1283791
        %v591 = vmul.f32 %v376, %v590
        %v592 = vmul.f32 %v580, 3.8918573e-05
        %v593 = vadd.f32 %v592, 0.001143296
        %v594 = vmul.f32 %v580, %v593
        %v595 = vadd.f32 %v594, 0.014752088
        %v596 = vmul.f32 %v580, %v595
        %v597 = vadd.f32 %v596, 0.112945676
        %v598 = vmul.f32 %v580, %v597
        %v599 = vadd.f32 %v598, 0.4994258
        %v600 = vmul.f32 %v580, %v599
        %v601 = vadd.f32 %v600, 1.0
        %v602 = vrcp.pop %v601
        %v603 = vmul.f32 %v601, %v602
        %v604 = vsub.f32 1.0, %v603
        %v605 = vmul.f32 %v602, %v604
        %v606 = vadd.f32 %v602, %v605
        %vm607 = vweird.f32 %v601
        %vm608 = vweird.f32 %v602
        %vm609 = vmor %vm607, %vm608
        %v610 = vsel %vm609, %v602, %v606
        %v611 = vand.u32 2147483647, %v601
        %vm612 = vcmp.eq.f32.partialorder %v611, 8.507059e+37
        %v613 = vand.u32 %v601, 2147483648
        %v614 = vor.u32 1.1754944e-38, %v613
        %v615 = vsel %vm612, %v614, %v610
        %v616 = vmul.f32 %v591, %v615
        %v617 = vmin.f32 %v616, 1.0
        %v618 = vmax.f32 %v617, -1.0
        %v619 = vmul.f32 %v377, %v377
        %v620 = vmin.f32 16.0, %v619
        %v621 = vmul.f32 %v620, 2.1237322e-06
        %v622 = vadd.f32 %v621, 0.00028619796
        %v623 = vmul.f32 %v620, %v622
        %v624 = vadd.f32 %v623, 0.0036580483
        %v625 = vmul.f32 %v620, %v624
        %v626 = vadd.f32 %v625, 0.05243302
        %v627 = vmul.f32 %v620, %v626
        %v628 = vadd.f32 %v627, 0.18741608
        %v629 = vmul.f32 %v620, %v628
        %v630 = vadd.f32 %v629, 1.1283791
        %v631 = vmul.f32 %v377, %v630
        %v632 = vmul.f32 %v620, 3.8918573e-05
        %v633 = vadd.f32 %v632, 0.001143296
        %v634 = vmul.f32 %v620, %v633
        %v635 = vadd.f32 %v634, 0.014752088
        %v636 = vmul.f32 %v620, %v635
        %v637 = vadd.f32 %v636, 0.112945676
        %v638 = vmul.f32 %v620, %v637
        %v639 = vadd.f32 %v638, 0.4994258
        %v640 = vmul.f32 %v620, %v639
        %v641 = vadd.f32 %v640, 1.0
        %v642 = vrcp.pop %v641
        %v643 = vmul.f32 %v641, %v642
        %v644 = vsub.f32 1.0, %v643
        %v645 = vmul.f32 %v642, %v644
        %v646 = vadd.f32 %v642, %v645
        %vm647 = vweird.f32 %v641
        %vm648 = vweird.f32 %v642
        %vm649 = vmor %vm647, %vm648
        %v650 = vsel %vm649, %v642, %v646
        %v651 = vand.u32 2147483647, %v641
        %vm652 = vcmp.eq.f32.partialorder %v651, 8.507059e+37
        %v653 = vand.u32 %v641, 2147483648
        %v654 = vor.u32 1.1754944e-38, %v653
        %v655 = vsel %vm652, %v654, %v650
        %v656 = vmul.f32 %v631, %v655
        %v657 = vmin.f32 %v656, 1.0
        %v658 = vmax.f32 %v657, -1.0
        %v659 = vmul.f32 %v378, %v378
        %v660 = vmin.f32 16.0, %v659
        %v661 = vmul.f32 %v660, 2.1237322e-06
        %v662 = vadd.f32 %v661, 0.00028619796
        %v663 = vmul.f32 %v660, %v662
        %v664 = vadd.f32 %v663, 0.0036580483
        %v665 = vmul.f32 %v660, %v664
        %v666 = vadd.f32 %v665, 0.05243302
        %v667 = vmul.f32 %v660, %v666
        %v668 = vadd.f32 %v667, 0.18741608
        %v669 = vmul.f32 %v660, %v668
        %v670 = vadd.f32 %v669, 1.1283791
        %v671 = vmul.f32 %v378, %v670
        %v672 = vmul.f32 %v660, 3.8918573e-05
        %v673 = vadd.f32 %v672, 0.001143296
        %v674 = vmul.f32 %v660, %v673
        %v675 = vadd.f32 %v674, 0.014752088
        %v676 = vmul.f32 %v660, %v675
        %v677 = vadd.f32 %v676, 0.112945676
        %v678 = vmul.f32 %v660, %v677
        %v679 = vadd.f32 %v678, 0.4994258
        %v680 = vmul.f32 %v660, %v679
        %v681 = vadd.f32 %v680, 1.0
        %v682 = vrcp.pop %v681
        %v683 = vmul.f32 %v681, %v682
        %v684 = vsub.f32 1.0, %v683
        %v685 = vmul.f32 %v682, %v684
        %v686 = vadd.f32 %v682, %v685
        %vm687 = vweird.f32 %v681
        %vm688 = vweird.f32 %v682
        %vm689 = vmor %vm687, %vm688
        %v690 = vsel %vm689, %v682, %v686
        %v691 = vand.u32 2147483647, %v681
        %vm692 = vcmp.eq.f32.partialorder %v691, 8.507059e+37
        %v693 = vand.u32 %v681, 2147483648
        %v694 = vor.u32 1.1754944e-38, %v693
        %v695 = vsel %vm692, %v694, %v690
        %v696 = vmul.f32 %v671, %v695
        %v697 = vmin.f32 %v696, 1.0
        %v698 = vmax.f32 %v697, -1.0
        %v699 = vadd.f32 %v418, 1.0
        %v700 = vadd.f32 %v458, 1.0
        %v701 = vadd.f32 %v498, 1.0
        %v702 = vadd.f32 %v538, 1.0
        %v703 = vadd.f32 %v578, 1.0
        %v704 = vadd.f32 %v618, 1.0
        %v705 = vadd.f32 %v658, 1.0
        %v706 = vadd.f32 %v698, 1.0
        %v707 = vmul.f32 %v363, %v699
        %v708 = vmul.f32 %v364, %v700
        %v709 = vmul.f32 %v365, %v701
        %v710 = vmul.f32 %v366, %v702
        %v711 = vmul.f32 %v367, %v703
        %v712 = vmul.f32 %v368, %v704
        %v713 = vmul.f32 %v369, %v705
        %v714 = vmul.f32 %v370, %v706
        %v715 = vld [vmem:[%s3] sm:$0xf]
        %v716 = vld [vmem:[%s4] sm:$0xf]
        %718 = vset.pattern.permute.xlu0 0
        %719 = vperm.xlu0 %718, %v716
        %v720 = vpop.permute.xlu0 %719
        %vm722 = vcmask 261120
        %v724 = vsel %vm722, %v715, 0
        %726 = vmatpush.msra.mxu0 0.0
        %727 = vmatpush.msra.mxu0 0.0
        %728 = vmatpush.msra.mxu0 0.0
        %729 = vmatpush.msra.mxu0 0.0
        %730 = vmatpush.msra.mxu0 0.0
        %731 = vmatpush.msra.mxu0 0.0
        %732 = vmatpush.msra.mxu0 0.0
        %733 = vmatpush.msra.mxu0 0.0
        %734 = vmatpush.msra.mxu0 0.0
        %735 = vmatpush.msra.mxu0 0.0
        %736 = vmatpush.msra.mxu0 0.0
        %737 = vmatpush.msra.mxu0 0.0
        %738 = vmatpush.msra.mxu0 %v713
        %739 = vmatpush.msra.mxu0 %v711
        %740 = vmatpush.msra.mxu0 %v709
        %741 = vmatpush.msra.mxu0 %v707
        %742 = vmatmul.f32.gmra.mxu0 %v724
        %v743 = vpop.f32.mrf.mxu0
        %v744 = vadd.f32 %v720, %v743
        %745 = vdwg.mxu0
        %746 = vmatpush.msra.mxu0 0.0
        %747 = vmatpush.msra.mxu0 0.0
        %748 = vmatpush.msra.mxu0 0.0
        %749 = vmatpush.msra.mxu0 0.0
        %750 = vmatpush.msra.mxu0 0.0
        %751 = vmatpush.msra.mxu0 0.0
        %752 = vmatpush.msra.mxu0 0.0
        %753 = vmatpush.msra.mxu0 0.0
        %754 = vmatpush.msra.mxu0 0.0
        %755 = vmatpush.msra.mxu0 0.0
        %756 = vmatpush.msra.mxu0 0.0
        %757 = vmatpush.msra.mxu0 0.0
        %758 = vmatpush.msra.mxu0 %v714
        %759 = vmatpush.msra.mxu0 %v712
        %760 = vmatpush.msra.mxu0 %v710
        %761 = vmatpush.msra.mxu0 %v708
        %762 = vmatmul.f32.gmra.mxu0 %v724
        %v763 = vpop.f32.mrf.mxu0
        %v764 = vadd.f32 %v720, %v763
        %765 = vdwg.mxu0
        %v768 = vrot.slane %v764, 4
        %v769 = vsel %vm300, %v744, %v768
        %771 = vst [vmem:[%s242] sm:$0xff] %v769
        %s772 = sand.u32 %s153, 1
        %s773 = scalar_lea.sflag [#allocation3], %s772
        %s774 = sand.u32 %s153, 1
        %s775 = smul.addr %s774, 8
        %s776 = scalar_lea.vmem [#allocation2], %s775
        // Predicated region
        $region41: #{tpu_custom_call.1} parent=39 // pred_check
          %p777 = pneg %p163
        $region42: #{tpu_custom_call.1} parent=39 // pred_check_branch
          %779 = sbr.rel (%p777) target = $region44
        $region43: #{tpu_custom_call.1} parent=39 // pred_region
          %s780 = smul.u32 2, %s24
          %782 = vsyncadd %s773, 0
          %s783 = smul.addr %s23, 2
          %s784 = sadd.s32 %s780, %s783
          %s785 = smul.addr %s784, 4
          %s786 = scalar_lea.hbm %s5, %s785
          %s788 = sshll.u32 %s776, 4
          %s789 = int_to_ptr.vmem [resolvable:$true] %s788
          %s790 = sshll.u32 %s786, 4
          %s791 = int_to_ptr.hbm [resolvable:$true] %s790
          %793 = dma.vmem_to_hbm [thread:$0]  %s789, 128, %s791, %s773
        $region44: #{tpu_custom_call.1} parent=39 // pred_fallthru
          _
      $region40: #{tpu_custom_call.1} parent=5 // pred_fallthru
        _
      %p794 = scmp.le.s32.totalorder 2, %s14
      // Predicated region
      $region45: #{tpu_custom_call.1} parent=5 // pred_check
        %p795 = pneg %p794
      $region46: #{tpu_custom_call.1} parent=5 // pred_check_branch
        %797 = sbr.rel (%p795) target = $region48
      $region47: #{tpu_custom_call.1} parent=5 // pred_region
        %s798 = ssub.s32 %s14, 2
        // Predicated region
        $region49: #{tpu_custom_call.1} parent=47 // pred_check
          %p799 = pneg %p169
        $region50: #{tpu_custom_call.1} parent=47 // pred_check_branch
          %801 = sbr.rel (%p799) target = $region52
        $region51: #{tpu_custom_call.1} parent=47 // pred_region
          %s802 = sand.u32 %s154, 1
          %s803 = scalar_lea.sflag [#allocation3], %s802
          %s804 = sand.u32 %s154, 1
          %s805 = smul.addr %s804, 8
          %s806 = scalar_lea.vmem [#allocation2], %s805
          %808 = dma.done %s803, 128
        $region52: #{tpu_custom_call.1} parent=47 // pred_fallthru
          _
      $region48: #{tpu_custom_call.1} parent=5 // pred_fallthru
        _
    $region6: #{tpu_custom_call.1} parent=1 // loop_footer
      %s18 = sadd.s32 1, %s14
    $region7: #{tpu_custom_call.1} parent=1 // loop_footer_branch
      %13 = sbr.rel target = $region3
    $region8: #{tpu_custom_call.1} parent=1 // loop_exit
      _
    %809 = vsyncpa [#allocation3], 1
    %s810 = scalar_lea.sflag [#allocation3], 1
    %811 = vsyncpa %s810, 1

</llo_original>
